<compile_context>
chip_gen: v6e
topology: v6e:2x2x1
jax: 0.10.0
libtpu: 0.0.40
codegen_flags: <defaults>
</compile_context>

<pallas_src>
import functools

import jax
import jax.numpy as jnp
from jax.experimental import pallas as pl
from jax.experimental.pallas import tpu as pltpu


def _round_up(x, m):
    return ((x + m - 1) // m) * m


def _deconv_sigmoid_kernel(x_ref, w_ref, b_ref, o_ref, *, K, dilation, Wp, NS):
    """Fused deconv (as forward conv) + bias + sigmoid, single grid step.

    x_ref : (Cin, NS + tail)  zero-padded input, spatial flattened with stride
                              Wp, batch folded into lanes (S lanes per sample)
    w_ref : (K*K, Cout, Cin)  per-tap forward-conv weights
    b_ref : (Cout, 1)         bias (f32)
    o_ref : (Cout, NS)        sigmoid(conv) in the model dtype
    """
    acc = jnp.zeros(o_ref.shape, jnp.float32)          # (Cout, NS)
    # Conv = sum over K*K taps; tap (kh,kw) only needs the input window shifted
    # by off lanes along the flattened-spatial axis.  The shifted window is a
    # static VMEM slice -> im2col never exists in HBM.
    for kh in range(K):
        for kw in range(K):
            off = (kh * dilation) * Wp + (kw * dilation)
            x_t = x_ref[:, pl.ds(off, NS)]              # (Cin, NS)
            w_t = w_ref[kh * K + kw]                    # (Cout, Cin)
            # Feed the MXU in the model dtype, accumulate in f32.
            acc = acc + jnp.dot(w_t, x_t, preferred_element_type=jnp.float32)
    acc = acc + b_ref[...]                              # bias: cheap VPU add
    # sigmoid(x) = 0.5*(tanh(x/2)+1): tanh on the EUP, no inf, no divide.
    o_ref[...] = (0.5 * (jnp.tanh(0.5 * acc) + 1.0)).astype(o_ref.dtype)


def bernoulli_layer_2d(x, weight_t, bias, *, kernel_size, padding,
                       dilation=1, stride=1):
    """Forward pass of BernoulliLayer2D; returns the Bernoulli probs.

    x        : (N, Cin, H, W)     NCHW, as in PyTorch
    weight_t : (Cin, Cout, K, K)  ConvTranspose2d weight layout
    bias     : (Cout,)
    """
    assert stride == 1, "TODO(synk): only stride=1 deconv is implemented"

    N, Cin, H, W = x.shape
    Cin_w, Cout, K, K2 = weight_t.shape
    assert K == kernel_size and K2 == kernel_size and Cin_w == Cin

    # ConvTranspose2d(stride=1, pad=p, dil=d) == forward conv with input
    # padding p' = d*(K-1) - p and flipped / channel-swapped weights.
    p_eq = dilation * (K - 1) - padding
    assert p_eq >= 0, (
        "unsupported ConvTranspose2d config: padding > dilation*(kernel_size-1)")
    x_pad = jnp.pad(x, ((0, 0), (0, 0), (p_eq, p_eq), (p_eq, p_eq)))
    Hp, Wp = H + 2 * p_eq, W + 2 * p_eq
    Hout = Hp - dilation * (K - 1)
    Wout = Wp - dilation * (K - 1)

    # Fold batch into lanes: each sample owns a lane segment of S (>= Hp*Wp,
    # multiple of 128).  A small tail keeps every tap's shifted window
    # in-bounds even for the (discarded) garbage columns of the last segment.
    S = _round_up(Hp * Wp, 128)
    NS = N * S
    max_off = dilation * (K - 1) * Wp + dilation * (K - 1)
    tail = _round_up(max_off, 128)

    xflat = x_pad.reshape(N, Cin, Hp * Wp)
    if S != Hp * Wp:
        xflat = jnp.pad(xflat, ((0, 0), (0, 0), (0, S - Hp * Wp)))
    xlanes = jnp.transpose(xflat, (1, 0, 2)).reshape(Cin, NS)
    if tail:
        xlanes = jnp.pad(xlanes, ((0, 0), (0, tail)))

    # (Cin,Cout,K,K) --flip spatial, swap io--> (Cout,Cin,K,K) --per-tap-->
    w_fwd = jnp.transpose(weight_t[:, :, ::-1, ::-1], (1, 0, 2, 3))
    w_taps = jnp.transpose(w_fwd, (2, 3, 0, 1)).reshape(K * K, Cout, Cin)
    b2d = bias.reshape(Cout, 1).astype(jnp.float32)

    kernel = functools.partial(_deconv_sigmoid_kernel,
                               K=K, dilation=dilation, Wp=Wp, NS=NS)

    out = pl.pallas_call(
        kernel,
        out_shape=jax.ShapeDtypeStruct((Cout, NS), x.dtype),
        grid_spec=pltpu.PrefetchScalarGridSpec(
            num_scalar_prefetch=0,
            grid=(1,),                              # single step: whole layer
            in_specs=[
                pl.BlockSpec((Cin, NS + tail), lambda i: (0, 0)),
                pl.BlockSpec((K * K, Cout, Cin), lambda i: (0, 0, 0)),
                pl.BlockSpec((Cout, 1), lambda i: (0, 0)),
            ],
            out_specs=pl.BlockSpec((Cout, NS), lambda i: (0, 0)),
        ),
        compiler_params=pltpu.CompilerParams(
            dimension_semantics=("arbitrary",)),
    )(xlanes, w_taps, b2d)

    # De-pad only at the module boundary (padded lanes hold garbage values and
    # must not be returned); NCHW as the torch module produces.
    out = jnp.transpose(out.reshape(Cout, N, S), (1, 0, 2))
    out = out[:, :, :Hout * Wp].reshape(N, Cout, Hout, Wp)[:, :, :, :Wout]
    return out


if __name__ == "__main__":
    # Module config (mirrors get_phidden defaults):
    #   pinput  = {'channels': 4, 'kernel_size': 3, 'dim': (16, 16)}
    #   poutput = {'channels': 1, 'dim': (16, 16)}
    #   padding = int(ceil(3/2)) = 2, dilation = 1, stride = 1, conv_dim = 2
    N, Cin, H, W = 2, 4, 16, 16
    Cout, K = 1, 3
    padding, dilation = 2, 1

    key = jax.random.PRNGKey(0)
    kx, kw, kb = jax.random.split(key, 3)

    x = jax.random.normal(kx, (N, Cin, H, W), dtype=jnp.float32)

    # Deterministic xavier_normal_ init for ConvTranspose2d weight (Cin,Cout,K,K)
    fan_in, fan_out = Cout * K * K, Cin * K * K
    xavier_std = (2.0 / (fan_in + fan_out)) ** 0.5
    weight_t = xavier_std * jax.random.normal(kw, (Cin, Cout, K, K),
                                              dtype=jnp.float32)
    bound = 1.0 / (fan_in ** 0.5)
    bias = jax.random.uniform(kb, (Cout,), minval=-bound, maxval=bound,
                              dtype=jnp.float32)

    probs = bernoulli_layer_2d(x, weight_t, bias,
                               kernel_size=K, padding=padding,
                               dilation=dilation, stride=1)
    probs = jax.block_until_ready(probs)

    # Reference check against XLA conv (same equivalent-forward-conv form).
    p_eq = dilation * (K - 1) - padding
    x_pad = jnp.pad(x, ((0, 0), (0, 0), (p_eq, p_eq), (p_eq, p_eq)))
    w_oihw = jnp.transpose(weight_t[:, :, ::-1, ::-1], (1, 0, 2, 3))
    ref = jax.lax.conv_general_dilated(
        x_pad, w_oihw, window_strides=(1, 1), padding="VALID",
        rhs_dilation=(dilation, dilation),
        dimension_numbers=("NCHW", "OIHW", "NCHW"))
    ref = jax.nn.sigmoid(ref + bias.reshape(1, Cout, 1, 1))

    Hout = H + dilation * (K - 1) - 2 * padding
    Wout = W + dilation * (K - 1) - 2 * padding
    assert probs.shape == (N, Cout, Hout, Wout), probs.shape
    assert jnp.allclose(probs, ref, atol=1e-5, rtol=1e-5), \
        float(jnp.max(jnp.abs(probs - ref)))

    print("KERNEL_OK")
</pallas_src>

<mosaic_0001>
module attributes {stable_mosaic.version = 11 : i64} {
  func.func @_deconv_sigmoid_kernel(%arg0: i32, %arg1: memref<4x640xf32, #tpu.memory_space<vmem>>, %arg2: memref<9x1x4xf32, #tpu.memory_space<vmem>>, %arg3: memref<1x1xf32, #tpu.memory_space<vmem>>, %arg4: memref<1x512xf32, #tpu.memory_space<vmem>>) attributes {dimension_semantics = [#tpu.dimension_semantics<arbitrary>], iteration_bounds = array<i64: 1>, scalar_prefetch = 0 : i64, scratch_operands = 0 : i64, tpu.core_type = #tpu.core_type<tc>, window_params = [{pipeline_mode = #tpu.pipeline_mode<synchronous>, transform_indices = @transform_0, window_bounds = array<i64: 4, 640>}, {pipeline_mode = #tpu.pipeline_mode<synchronous>, transform_indices = @transform_1, window_bounds = array<i64: 9, 1, 4>}, {pipeline_mode = #tpu.pipeline_mode<synchronous>, transform_indices = @transform_2, window_bounds = array<i64: 1, 1>}, {pipeline_mode = #tpu.pipeline_mode<synchronous>, transform_indices = @transform_3, window_bounds = array<i64: 1, 512>}]} {
    %cst = arith.constant 0.000000e+00 : f32
    %0 = vector.broadcast %cst : f32 to vector<1x512xf32>
    %c0 = arith.constant 0 : index
    %c0_0 = arith.constant 0 : index
    %1 = vector.load %arg1[%c0, %c0_0] : memref<4x640xf32, #tpu.memory_space<vmem>>, vector<4x512xf32>
    %c0_1 = arith.constant 0 : index
    %c0_2 = arith.constant 0 : index
    %c0_3 = arith.constant 0 : index
    %2 = vector.load %arg2[%c0_1, %c0_2, %c0_3] : memref<9x1x4xf32, #tpu.memory_space<vmem>>, vector<1x1x4xf32>
    %3 = vector.shape_cast %2 : vector<1x1x4xf32> to vector<1x4xf32>
    %cst_4 = arith.constant dense<0.000000e+00> : vector<1x512xf32>
    %4 = tpu.matmul %3, %1, %cst_4 {dimension_numbers = #tpu.dot_dimension_numbers<[1], [0], [0], [1], [0, 0, 1, 1], [], []>} : vector<1x4xf32>, vector<4x512xf32>, vector<1x512xf32> -> vector<1x512xf32>
    %5 = arith.addf %0, %4 : vector<1x512xf32>
    %c0_5 = arith.constant 0 : index
    %c1 = arith.constant 1 : index
    %6 = vector.load %arg1[%c0_5, %c1] : memref<4x640xf32, #tpu.memory_space<vmem>>, vector<4x512xf32>
    %c1_6 = arith.constant 1 : index
    %c0_7 = arith.constant 0 : index
    %c0_8 = arith.constant 0 : index
    %7 = vector.load %arg2[%c1_6, %c0_7, %c0_8] : memref<9x1x4xf32, #tpu.memory_space<vmem>>, vector<1x1x4xf32>
    %8 = vector.shape_cast %7 : vector<1x1x4xf32> to vector<1x4xf32>
    %cst_9 = arith.constant dense<0.000000e+00> : vector<1x512xf32>
    %9 = tpu.matmul %8, %6, %cst_9 {dimension_numbers = #tpu.dot_dimension_numbers<[1], [0], [0], [1], [0, 0, 1, 1], [], []>} : vector<1x4xf32>, vector<4x512xf32>, vector<1x512xf32> -> vector<1x512xf32>
    %10 = arith.addf %5, %9 : vector<1x512xf32>
    %c0_10 = arith.constant 0 : index
    %c2 = arith.constant 2 : index
    %11 = vector.load %arg1[%c0_10, %c2] : memref<4x640xf32, #tpu.memory_space<vmem>>, vector<4x512xf32>
    %c2_11 = arith.constant 2 : index
    %c0_12 = arith.constant 0 : index
    %c0_13 = arith.constant 0 : index
    %12 = vector.load %arg2[%c2_11, %c0_12, %c0_13] : memref<9x1x4xf32, #tpu.memory_space<vmem>>, vector<1x1x4xf32>
    %13 = vector.shape_cast %12 : vector<1x1x4xf32> to vector<1x4xf32>
    %cst_14 = arith.constant dense<0.000000e+00> : vector<1x512xf32>
    %14 = tpu.matmul %13, %11, %cst_14 {dimension_numbers = #tpu.dot_dimension_numbers<[1], [0], [0], [1], [0, 0, 1, 1], [], []>} : vector<1x4xf32>, vector<4x512xf32>, vector<1x512xf32> -> vector<1x512xf32>
    %15 = arith.addf %10, %14 : vector<1x512xf32>
    %c0_15 = arith.constant 0 : index
    %c16 = arith.constant 16 : index
    %16 = vector.load %arg1[%c0_15, %c16] : memref<4x640xf32, #tpu.memory_space<vmem>>, vector<4x512xf32>
    %c3 = arith.constant 3 : index
    %c0_16 = arith.constant 0 : index
    %c0_17 = arith.constant 0 : index
    %17 = vector.load %arg2[%c3, %c0_16, %c0_17] : memref<9x1x4xf32, #tpu.memory_space<vmem>>, vector<1x1x4xf32>
    %18 = vector.shape_cast %17 : vector<1x1x4xf32> to vector<1x4xf32>
    %cst_18 = arith.constant dense<0.000000e+00> : vector<1x512xf32>
    %19 = tpu.matmul %18, %16, %cst_18 {dimension_numbers = #tpu.dot_dimension_numbers<[1], [0], [0], [1], [0, 0, 1, 1], [], []>} : vector<1x4xf32>, vector<4x512xf32>, vector<1x512xf32> -> vector<1x512xf32>
    %20 = arith.addf %15, %19 : vector<1x512xf32>
    %c0_19 = arith.constant 0 : index
    %c17 = arith.constant 17 : index
    %21 = vector.load %arg1[%c0_19, %c17] : memref<4x640xf32, #tpu.memory_space<vmem>>, vector<4x512xf32>
    %c4 = arith.constant 4 : index
    %c0_20 = arith.constant 0 : index
    %c0_21 = arith.constant 0 : index
    %22 = vector.load %arg2[%c4, %c0_20, %c0_21] : memref<9x1x4xf32, #tpu.memory_space<vmem>>, vector<1x1x4xf32>
    %23 = vector.shape_cast %22 : vector<1x1x4xf32> to vector<1x4xf32>
    %cst_22 = arith.constant dense<0.000000e+00> : vector<1x512xf32>
    %24 = tpu.matmul %23, %21, %cst_22 {dimension_numbers = #tpu.dot_dimension_numbers<[1], [0], [0], [1], [0, 0, 1, 1], [], []>} : vector<1x4xf32>, vector<4x512xf32>, vector<1x512xf32> -> vector<1x512xf32>
    %25 = arith.addf %20, %24 : vector<1x512xf32>
    %c0_23 = arith.constant 0 : index
    %c18 = arith.constant 18 : index
    %26 = vector.load %arg1[%c0_23, %c18] : memref<4x640xf32, #tpu.memory_space<vmem>>, vector<4x512xf32>
    %c5 = arith.constant 5 : index
    %c0_24 = arith.constant 0 : index
    %c0_25 = arith.constant 0 : index
    %27 = vector.load %arg2[%c5, %c0_24, %c0_25] : memref<9x1x4xf32, #tpu.memory_space<vmem>>, vector<1x1x4xf32>
    %28 = vector.shape_cast %27 : vector<1x1x4xf32> to vector<1x4xf32>
    %cst_26 = arith.constant dense<0.000000e+00> : vector<1x512xf32>
    %29 = tpu.matmul %28, %26, %cst_26 {dimension_numbers = #tpu.dot_dimension_numbers<[1], [0], [0], [1], [0, 0, 1, 1], [], []>} : vector<1x4xf32>, vector<4x512xf32>, vector<1x512xf32> -> vector<1x512xf32>
    %30 = arith.addf %25, %29 : vector<1x512xf32>
    %c0_27 = arith.constant 0 : index
    %c32 = arith.constant 32 : index
    %31 = vector.load %arg1[%c0_27, %c32] : memref<4x640xf32, #tpu.memory_space<vmem>>, vector<4x512xf32>
    %c6 = arith.constant 6 : index
    %c0_28 = arith.constant 0 : index
    %c0_29 = arith.constant 0 : index
    %32 = vector.load %arg2[%c6, %c0_28, %c0_29] : memref<9x1x4xf32, #tpu.memory_space<vmem>>, vector<1x1x4xf32>
    %33 = vector.shape_cast %32 : vector<1x1x4xf32> to vector<1x4xf32>
    %cst_30 = arith.constant dense<0.000000e+00> : vector<1x512xf32>
    %34 = tpu.matmul %33, %31, %cst_30 {dimension_numbers = #tpu.dot_dimension_numbers<[1], [0], [0], [1], [0, 0, 1, 1], [], []>} : vector<1x4xf32>, vector<4x512xf32>, vector<1x512xf32> -> vector<1x512xf32>
    %35 = arith.addf %30, %34 : vector<1x512xf32>
    %c0_31 = arith.constant 0 : index
    %c33 = arith.constant 33 : index
    %36 = vector.load %arg1[%c0_31, %c33] : memref<4x640xf32, #tpu.memory_space<vmem>>, vector<4x512xf32>
    %c7 = arith.constant 7 : index
    %c0_32 = arith.constant 0 : index
    %c0_33 = arith.constant 0 : index
    %37 = vector.load %arg2[%c7, %c0_32, %c0_33] : memref<9x1x4xf32, #tpu.memory_space<vmem>>, vector<1x1x4xf32>
    %38 = vector.shape_cast %37 : vector<1x1x4xf32> to vector<1x4xf32>
    %cst_34 = arith.constant dense<0.000000e+00> : vector<1x512xf32>
    %39 = tpu.matmul %38, %36, %cst_34 {dimension_numbers = #tpu.dot_dimension_numbers<[1], [0], [0], [1], [0, 0, 1, 1], [], []>} : vector<1x4xf32>, vector<4x512xf32>, vector<1x512xf32> -> vector<1x512xf32>
    %40 = arith.addf %35, %39 : vector<1x512xf32>
    %c0_35 = arith.constant 0 : index
    %c34 = arith.constant 34 : index
    %41 = vector.load %arg1[%c0_35, %c34] : memref<4x640xf32, #tpu.memory_space<vmem>>, vector<4x512xf32>
    %c8 = arith.constant 8 : index
    %c0_36 = arith.constant 0 : index
    %c0_37 = arith.constant 0 : index
    %42 = vector.load %arg2[%c8, %c0_36, %c0_37] : memref<9x1x4xf32, #tpu.memory_space<vmem>>, vector<1x1x4xf32>
    %43 = vector.shape_cast %42 : vector<1x1x4xf32> to vector<1x4xf32>
    %cst_38 = arith.constant dense<0.000000e+00> : vector<1x512xf32>
    %44 = tpu.matmul %43, %41, %cst_38 {dimension_numbers = #tpu.dot_dimension_numbers<[1], [0], [0], [1], [0, 0, 1, 1], [], []>} : vector<1x4xf32>, vector<4x512xf32>, vector<1x512xf32> -> vector<1x512xf32>
    %45 = arith.addf %40, %44 : vector<1x512xf32>
    %c0_39 = arith.constant 0 : index
    %c0_40 = arith.constant 0 : index
    %46 = vector.load %arg3[%c0_39, %c0_40] : memref<1x1xf32, #tpu.memory_space<vmem>>, vector<1x1xf32>
    %47 = vector.broadcast %46 : vector<1x1xf32> to vector<1x512xf32>
    %48 = arith.addf %45, %47 : vector<1x512xf32>
    %cst_41 = arith.constant 5.000000e-01 : f32
    %49 = vector.broadcast %cst_41 : f32 to vector<1x512xf32>
    %50 = arith.mulf %49, %48 : vector<1x512xf32>
    %51 = math.tanh %50 : vector<1x512xf32>
    %cst_42 = arith.constant 1.000000e+00 : f32
    %52 = vector.broadcast %cst_42 : f32 to vector<1x512xf32>
    %53 = arith.addf %51, %52 : vector<1x512xf32>
    %cst_43 = arith.constant 5.000000e-01 : f32
    %54 = vector.broadcast %cst_43 : f32 to vector<1x512xf32>
    %55 = arith.mulf %54, %53 : vector<1x512xf32>
    %c0_44 = arith.constant 0 : index
    %c0_45 = arith.constant 0 : index
    %56 = vector.load %arg4[%c0_44, %c0_45] : memref<1x512xf32, #tpu.memory_space<vmem>>, vector<1x512xf32>
    tpu.vector_store %arg4[%c0_44, %c0_45], %55 {strides = array<i32>} : memref<1x512xf32, #tpu.memory_space<vmem>>, vector<1x512xf32>,
    return
  }
  func.func @transform_0(%arg0: i32) -> (i32, i32) {
    %c0_i32 = arith.constant 0 : i32
    %c0_i32_0 = arith.constant 0 : i32
    %c0_i32_1 = arith.constant 0 : i32
    return %c0_i32, %c0_i32_0 : i32, i32
  }
  func.func @transform_1(%arg0: i32) -> (i32, i32, i32) {
    %c0_i32 = arith.constant 0 : i32
    %c0_i32_0 = arith.constant 0 : i32
    %c0_i32_1 = arith.constant 0 : i32
    %c0_i32_2 = arith.constant 0 : i32
    return %c0_i32, %c0_i32_0, %c0_i32_1 : i32, i32, i32
  }
  func.func @transform_2(%arg0: i32) -> (i32, i32) {
    %c0_i32 = arith.constant 0 : i32
    %c0_i32_0 = arith.constant 0 : i32
    %c0_i32_1 = arith.constant 0 : i32
    return %c0_i32, %c0_i32_0 : i32, i32
  }
  func.func @transform_3(%arg0: i32) -> (i32, i32) {
    %c0_i32 = arith.constant 0 : i32
    %c0_i32_0 = arith.constant 0 : i32
    %c0_i32_1 = arith.constant 0 : i32
    return %c0_i32, %c0_i32_0 : i32, i32
  }
}

</mosaic_0001>

<llo_original>
// kernel: tpu_custom_call.1
$region0: #{tpu_custom_call.1}
  #allocation0 [shape = 'u32[]', space=smem, size = 0x4, offset = 0x4, fixed_abs, tag = 'smem constant byte address 0x4 - core index']
  #allocation1 [shape = 'u32[144,128]{1,0:T(1,128)}', space=vmem, size = 0x12000, scoped, tag = 'internal scratch']
  #allocation2 [shape = 'f32[1,1]{1,0:T(1,128)S(1)}', space=vmem, size = 0x200, scoped, tag = 'scoped memory for tpu_custom_call.1']
  %s0 = inlined_call_operand.hbm [shape: f32[4,640], index: 0, kind: input, shape index: {}]
  %s1 = inlined_call_operand.vmem [shape: f32[9,1,4], index: 1, kind: input, shape index: {}]
  %s2 = inlined_call_operand.<no memory space> [shape: f32[1,1], index: 2, kind: input, shape index: {}]
  %s3 = inlined_call_operand.hbm [shape: f32[1,512], index: 3, kind: output, shape index: {}]
  %s4 = sld [smem:[#allocation0]]
  $region26: #{tpu_custom_call.1} parent=0
    _
  %s6 = ssub.s32 1, %s4
  %s7 = scalar_select 0, %s6, %s4
  %v8 = vstv %s2
  %9 = vst [vmem:[#allocation2] sm:$0x1] %v8
  $region1: #{tpu_custom_call.1} parent=0
    #allocation3 [shape = 'u8[10240]{0}', space=vmem, size = 0x2800, scoped, tag = 'input window, operand 0, single buffered']
    #allocation4 [shape = 's32[1]{0}', space=sflag, size = 0x4, scoped, tag = 'scoped memory for tpu_custom_call.1']
    #allocation5 [shape = 's32[1]{0}', space=sflag, size = 0x4, scoped, tag = 'scoped memory for tpu_custom_call.1']
    #allocation6 [shape = 'u8[2048]{0}', space=vmem, size = 0x800, scoped, tag = 'output window, operand 0, single buffered']
    %10 = vsyncpa [#allocation4], 0
    %11 = vsyncpa [#allocation5], 0
    // Predicated region
    $region2: #{tpu_custom_call.1} parent=1 // pred_check
      _
    $region3: #{tpu_custom_call.1} parent=1 // pred_check_branch
      %13 = sbr.rel (0) target = $region5
    $region4: #{tpu_custom_call.1} parent=1 // pred_region
      %s15 = ssub.s32 320, 320
      %16 = vsyncadd [#allocation4], %s15
      %s18 = sshll.u32 [#allocation3], 4
      %s19 = int_to_ptr.vmem [resolvable:$true] %s18
      %21 = dma.hbm_to_vmem [thread:$0]  %s0, 320, %s19, [#allocation4]
    $region5: #{tpu_custom_call.1} parent=1 // pred_fallthru
      _
    // Predicated region
    $region6: #{tpu_custom_call.1} parent=1 // pred_check
      _
    $region7: #{tpu_custom_call.1} parent=1 // pred_check_branch
      %23 = sbr.rel (0) target = $region9
    $region8: #{tpu_custom_call.1} parent=1 // pred_region
      _
    $region9: #{tpu_custom_call.1} parent=1 // pred_fallthru
      _
    // Predicated region
    $region10: #{tpu_custom_call.1} parent=1 // pred_check
      _
    $region11: #{tpu_custom_call.1} parent=1 // pred_check_branch
      %25 = sbr.rel (0) target = $region13
    $region12: #{tpu_custom_call.1} parent=1 // pred_region
      _
    $region13: #{tpu_custom_call.1} parent=1 // pred_fallthru
      _
    // Predicated region
    $region14: #{tpu_custom_call.1} parent=1 // pred_check
      _
    $region15: #{tpu_custom_call.1} parent=1 // pred_check_branch
      %27 = sbr.rel (0) target = $region17
    $region16: #{tpu_custom_call.1} parent=1 // pred_region
      %28 = dma.done [#allocation4], 320
    $region17: #{tpu_custom_call.1} parent=1 // pred_fallthru
      _
    %v29 = vld [vmem:[#allocation3] sm:$0xff]
    %v30 = vld [vmem:[#allocation3 + $0x8] sm:$0xff]
    %v31 = vld [vmem:[%s1] sm:$0x1]
    %v32 = vld [vmem:[#allocation3] sm:$0xff]
    %v33 = vld [vmem:[#allocation3 + $0x8] sm:$0xff]
    %v34 = vld [vmem:[#allocation3 + $0x10] sm:$0xf]
    %s35 = scalar_lea.vmem %s1, 1
    %v36 = vld [vmem:[%s35] sm:$0x1]
    %v40 = vcombine.high %v32, %v32
    %v41 = vcombine.high %v33, %v33
    %42 = vrot.lane.b32.xlu0 %v32, 127
    %v43 = vpop.permute.xlu0 %42
    %44 = vrot.lane.b32.xlu0 %v40, 127
    %v45 = vpop.permute.xlu0 %44
    %46 = vrot.lane.b32.xlu0 %v33, 127
    %v47 = vpop.permute.xlu0 %46
    %48 = vrot.lane.b32.xlu0 %v41, 127
    %v49 = vpop.permute.xlu0 %48
    %50 = vrot.lane.b32.xlu0 %v34, 127
    %v51 = vpop.permute.xlu0 %50
    %vm52 = vcmask 1039360
    %v53 = vsel %vm52, %v43, %v45
    %v54 = vsel %vm52, %v45, %v47
    %v55 = vsel %vm52, %v47, %v49
    %v56 = vsel %vm52, %v49, %v51
    %vm57 = vcmask 31744
    %v59 = vsel %vm57, %v36, 0
    %vm61 = vcmask 1043456
    %v62 = vsel %vm61, %v53, 0
    %v64 = vsel %vm61, %v54, 0
    %v66 = vsel %vm61, %v55, 0
    %v68 = vsel %vm61, %v56, 0
    %70 = vmatprep.subr.mxu0 0.0
    %71 = vmatpush1.msra.mxu0 0.0
    %72 = vmatprep.subr.mxu0 0.0
    %73 = vmatpush1.msra.mxu0 0.0
    %74 = vmatprep.subr.mxu0 0.0
    %75 = vmatpush1.msra.mxu0 0.0
    %76 = vmatprep.subr.mxu0 0.0
    %77 = vmatpush1.msra.mxu0 0.0
    %78 = vmatprep.subr.mxu0 0.0
    %79 = vmatpush1.msra.mxu0 0.0
    %80 = vmatprep.subr.mxu0 0.0
    %81 = vmatpush1.msra.mxu0 0.0
    %82 = vmatprep.subr.mxu0 0.0
    %83 = vmatpush1.msra.mxu0 0.0
    %84 = vmatprep.subr.mxu0 0.0
    %85 = vmatpush1.msra.mxu0 0.0
    %86 = vmatprep.subr.mxu0 0.0
    %87 = vmatpush1.msra.mxu0 0.0
    %88 = vmatprep.subr.mxu0 0.0
    %89 = vmatpush1.msra.mxu0 0.0
    %90 = vmatprep.subr.mxu0 0.0
    %91 = vmatpush1.msra.mxu0 0.0
    %92 = vmatprep.subr.mxu0 0.0
    %93 = vmatpush1.msra.mxu0 0.0
    %94 = vmatprep.subr.mxu0 0.0
    %95 = vmatpush1.msra.mxu0 0.0
    %96 = vmatprep.subr.mxu0 0.0
    %97 = vmatpush1.msra.mxu0 0.0
    %98 = vmatprep.subr.mxu0 0.0
    %99 = vmatpush1.msra.mxu0 0.0
    %100 = vmatprep.subr.mxu0 %v64
    %101 = vmatpush1.msra.mxu0 %v62
    %102 = vmatprep.subr.mxu0 0.0
    %103 = vmatpush2.msra.mxu0 0.0
    %104 = vmatprep.subr.mxu0 0.0
    %105 = vmatpush2.msra.mxu0 0.0
    %106 = vmatprep.subr.mxu0 0.0
    %107 = vmatpush2.msra.mxu0 0.0
    %108 = vmatprep.subr.mxu0 0.0
    %109 = vmatpush2.msra.mxu0 0.0
    %110 = vmatprep.subr.mxu0 0.0
    %111 = vmatpush2.msra.mxu0 0.0
    %112 = vmatprep.subr.mxu0 0.0
    %113 = vmatpush2.msra.mxu0 0.0
    %114 = vmatprep.subr.mxu0 0.0
    %115 = vmatpush2.msra.mxu0 0.0
    %116 = vmatprep.subr.mxu0 0.0
    %117 = vmatpush2.msra.mxu0 0.0
    %118 = vmatprep.subr.mxu0 0.0
    %119 = vmatpush2.msra.mxu0 0.0
    %120 = vmatprep.subr.mxu0 0.0
    %121 = vmatpush2.msra.mxu0 0.0
    %122 = vmatprep.subr.mxu0 0.0
    %123 = vmatpush2.msra.mxu0 0.0
    %124 = vmatprep.subr.mxu0 0.0
    %125 = vmatpush2.msra.mxu0 0.0
    %126 = vmatprep.subr.mxu0 0.0
    %127 = vmatpush2.msra.mxu0 0.0
    %128 = vmatprep.subr.mxu0 0.0
    %129 = vmatpush2.msra.mxu0 0.0
    %130 = vmatprep.subr.mxu0 0.0
    %131 = vmatpush2.msra.mxu0 0.0
    %132 = vmatprep.subr.mxu0 0.0
    %133 = vmatpush2.msra.mxu0 0.0
    %134 = vmatprep.mubr.f32.mxu0 0.0
    %135 = vmatmul.mubr.f32.gmra.mxu0 %v59
    %v136 = vpop.f32.mrf.mxu0
    %v137 = vadd.f32 0.0, %v136
    %v138 = vpop.f32.mrf.mxu0
    %v139 = vadd.f32 0.0, %v138
    %140 = vdwg.mxu0
    %141 = vmatprep.subr.mxu0 0.0
    %142 = vmatpush1.msra.mxu0 0.0
    %143 = vmatprep.subr.mxu0 0.0
    %144 = vmatpush1.msra.mxu0 0.0
    %145 = vmatprep.subr.mxu0 0.0
    %146 = vmatpush1.msra.mxu0 0.0
    %147 = vmatprep.subr.mxu0 0.0
    %148 = vmatpush1.msra.mxu0 0.0
    %149 = vmatprep.subr.mxu0 0.0
    %150 = vmatpush1.msra.mxu0 0.0
    %151 = vmatprep.subr.mxu0 0.0
    %152 = vmatpush1.msra.mxu0 0.0
    %153 = vmatprep.subr.mxu0 0.0
    %154 = vmatpush1.msra.mxu0 0.0
    %155 = vmatprep.subr.mxu0 0.0
    %156 = vmatpush1.msra.mxu0 0.0
    %157 = vmatprep.subr.mxu0 0.0
    %158 = vmatpush1.msra.mxu0 0.0
    %159 = vmatprep.subr.mxu0 0.0
    %160 = vmatpush1.msra.mxu0 0.0
    %161 = vmatprep.subr.mxu0 0.0
    %162 = vmatpush1.msra.mxu0 0.0
    %163 = vmatprep.subr.mxu0 0.0
    %164 = vmatpush1.msra.mxu0 0.0
    %165 = vmatprep.subr.mxu0 0.0
    %166 = vmatpush1.msra.mxu0 0.0
    %167 = vmatprep.subr.mxu0 0.0
    %168 = vmatpush1.msra.mxu0 0.0
    %169 = vmatprep.subr.mxu0 0.0
    %170 = vmatpush1.msra.mxu0 0.0
    %171 = vmatprep.subr.mxu0 %v68
    %172 = vmatpush1.msra.mxu0 %v66
    %173 = vmatprep.subr.mxu0 0.0
    %174 = vmatpush2.msra.mxu0 0.0
    %175 = vmatprep.subr.mxu0 0.0
    %176 = vmatpush2.msra.mxu0 0.0
    %177 = vmatprep.subr.mxu0 0.0
    %178 = vmatpush2.msra.mxu0 0.0
    %179 = vmatprep.subr.mxu0 0.0
    %180 = vmatpush2.msra.mxu0 0.0
    %181 = vmatprep.subr.mxu0 0.0
    %182 = vmatpush2.msra.mxu0 0.0
    %183 = vmatprep.subr.mxu0 0.0
    %184 = vmatpush2.msra.mxu0 0.0
    %185 = vmatprep.subr.mxu0 0.0
    %186 = vmatpush2.msra.mxu0 0.0
    %187 = vmatprep.subr.mxu0 0.0
    %188 = vmatpush2.msra.mxu0 0.0
    %189 = vmatprep.subr.mxu0 0.0
    %190 = vmatpush2.msra.mxu0 0.0
    %191 = vmatprep.subr.mxu0 0.0
    %192 = vmatpush2.msra.mxu0 0.0
    %193 = vmatprep.subr.mxu0 0.0
    %194 = vmatpush2.msra.mxu0 0.0
    %195 = vmatprep.subr.mxu0 0.0
    %196 = vmatpush2.msra.mxu0 0.0
    %197 = vmatprep.subr.mxu0 0.0
    %198 = vmatpush2.msra.mxu0 0.0
    %199 = vmatprep.subr.mxu0 0.0
    %200 = vmatpush2.msra.mxu0 0.0
    %201 = vmatprep.subr.mxu0 0.0
    %202 = vmatpush2.msra.mxu0 0.0
    %203 = vmatprep.subr.mxu0 0.0
    %204 = vmatpush2.msra.mxu0 0.0
    %205 = vmatprep.mubr.f32.mxu0 0.0
    %206 = vmatmul.mubr.f32.gmra.mxu0 %v59
    %v207 = vpop.f32.mrf.mxu0
    %v208 = vadd.f32 0.0, %v207
    %v209 = vpop.f32.mrf.mxu0
    %v210 = vadd.f32 0.0, %v209
    %211 = vdwg.mxu0
    %v214 = vcombine.high %v29, %v29
    %v215 = vcombine.high %v30, %v30
    %v217 = vsel %vm57, %v31, 0
    %v219 = vsel %vm61, %v29, 0
    %v221 = vsel %vm61, %v214, 0
    %v223 = vsel %vm61, %v30, 0
    %v225 = vsel %vm61, %v215, 0
    %227 = vmatprep.subr.mxu0 0.0
    %228 = vmatpush1.msra.mxu0 0.0
    %229 = vmatprep.subr.mxu0 0.0
    %230 = vmatpush1.msra.mxu0 0.0
    %231 = vmatprep.subr.mxu0 0.0
    %232 = vmatpush1.msra.mxu0 0.0
    %233 = vmatprep.subr.mxu0 0.0
    %234 = vmatpush1.msra.mxu0 0.0
    %235 = vmatprep.subr.mxu0 0.0
    %236 = vmatpush1.msra.mxu0 0.0
    %237 = vmatprep.subr.mxu0 0.0
    %238 = vmatpush1.msra.mxu0 0.0
    %239 = vmatprep.subr.mxu0 0.0
    %240 = vmatpush1.msra.mxu0 0.0
    %241 = vmatprep.subr.mxu0 0.0
    %242 = vmatpush1.msra.mxu0 0.0
    %243 = vmatprep.subr.mxu0 0.0
    %244 = vmatpush1.msra.mxu0 0.0
    %245 = vmatprep.subr.mxu0 0.0
    %246 = vmatpush1.msra.mxu0 0.0
    %247 = vmatprep.subr.mxu0 0.0
    %248 = vmatpush1.msra.mxu0 0.0
    %249 = vmatprep.subr.mxu0 0.0
    %250 = vmatpush1.msra.mxu0 0.0
    %251 = vmatprep.subr.mxu0 0.0
    %252 = vmatpush1.msra.mxu0 0.0
    %253 = vmatprep.subr.mxu0 0.0
    %254 = vmatpush1.msra.mxu0 0.0
    %255 = vmatprep.subr.mxu0 0.0
    %256 = vmatpush1.msra.mxu0 0.0
    %257 = vmatprep.subr.mxu0 %v221
    %258 = vmatpush1.msra.mxu0 %v219
    %259 = vmatprep.subr.mxu0 0.0
    %260 = vmatpush2.msra.mxu0 0.0
    %261 = vmatprep.subr.mxu0 0.0
    %262 = vmatpush2.msra.mxu0 0.0
    %263 = vmatprep.subr.mxu0 0.0
    %264 = vmatpush2.msra.mxu0 0.0
    %265 = vmatprep.subr.mxu0 0.0
    %266 = vmatpush2.msra.mxu0 0.0
    %267 = vmatprep.subr.mxu0 0.0
    %268 = vmatpush2.msra.mxu0 0.0
    %269 = vmatprep.subr.mxu0 0.0
    %270 = vmatpush2.msra.mxu0 0.0
    %271 = vmatprep.subr.mxu0 0.0
    %272 = vmatpush2.msra.mxu0 0.0
    %273 = vmatprep.subr.mxu0 0.0
    %274 = vmatpush2.msra.mxu0 0.0
    %275 = vmatprep.subr.mxu0 0.0
    %276 = vmatpush2.msra.mxu0 0.0
    %277 = vmatprep.subr.mxu0 0.0
    %278 = vmatpush2.msra.mxu0 0.0
    %279 = vmatprep.subr.mxu0 0.0
    %280 = vmatpush2.msra.mxu0 0.0
    %281 = vmatprep.subr.mxu0 0.0
    %282 = vmatpush2.msra.mxu0 0.0
    %283 = vmatprep.subr.mxu0 0.0
    %284 = vmatpush2.msra.mxu0 0.0
    %285 = vmatprep.subr.mxu0 0.0
    %286 = vmatpush2.msra.mxu0 0.0
    %287 = vmatprep.subr.mxu0 0.0
    %288 = vmatpush2.msra.mxu0 0.0
    %289 = vmatprep.subr.mxu0 0.0
    %290 = vmatpush2.msra.mxu0 0.0
    %291 = vmatprep.mubr.f32.mxu0 0.0
    %292 = vmatmul.mubr.f32.gmra.mxu0 %v217
    %v293 = vpop.f32.mrf.mxu0
    %v294 = vadd.f32 %v137, %v293
    %v295 = vpop.f32.mrf.mxu0
    %v296 = vadd.f32 %v139, %v295
    %297 = vdwg.mxu0
    %298 = vmatprep.subr.mxu0 0.0
    %299 = vmatpush1.msra.mxu0 0.0
    %300 = vmatprep.subr.mxu0 0.0
    %301 = vmatpush1.msra.mxu0 0.0
    %302 = vmatprep.subr.mxu0 0.0
    %303 = vmatpush1.msra.mxu0 0.0
    %304 = vmatprep.subr.mxu0 0.0
    %305 = vmatpush1.msra.mxu0 0.0
    %306 = vmatprep.subr.mxu0 0.0
    %307 = vmatpush1.msra.mxu0 0.0
    %308 = vmatprep.subr.mxu0 0.0
    %309 = vmatpush1.msra.mxu0 0.0
    %310 = vmatprep.subr.mxu0 0.0
    %311 = vmatpush1.msra.mxu0 0.0
    %312 = vmatprep.subr.mxu0 0.0
    %313 = vmatpush1.msra.mxu0 0.0
    %314 = vmatprep.subr.mxu0 0.0
    %315 = vmatpush1.msra.mxu0 0.0
    %316 = vmatprep.subr.mxu0 0.0
    %317 = vmatpush1.msra.mxu0 0.0
    %318 = vmatprep.subr.mxu0 0.0
    %319 = vmatpush1.msra.mxu0 0.0
    %320 = vmatprep.subr.mxu0 0.0
    %321 = vmatpush1.msra.mxu0 0.0
    %322 = vmatprep.subr.mxu0 0.0
    %323 = vmatpush1.msra.mxu0 0.0
    %324 = vmatprep.subr.mxu0 0.0
    %325 = vmatpush1.msra.mxu0 0.0
    %326 = vmatprep.subr.mxu0 0.0
    %327 = vmatpush1.msra.mxu0 0.0
    %328 = vmatprep.subr.mxu0 %v225
    %329 = vmatpush1.msra.mxu0 %v223
    %330 = vmatprep.subr.mxu0 0.0
    %331 = vmatpush2.msra.mxu0 0.0
    %332 = vmatprep.subr.mxu0 0.0
    %333 = vmatpush2.msra.mxu0 0.0
    %334 = vmatprep.subr.mxu0 0.0
    %335 = vmatpush2.msra.mxu0 0.0
    %336 = vmatprep.subr.mxu0 0.0
    %337 = vmatpush2.msra.mxu0 0.0
    %338 = vmatprep.subr.mxu0 0.0
    %339 = vmatpush2.msra.mxu0 0.0
    %340 = vmatprep.subr.mxu0 0.0
    %341 = vmatpush2.msra.mxu0 0.0
    %342 = vmatprep.subr.mxu0 0.0
    %343 = vmatpush2.msra.mxu0 0.0
    %344 = vmatprep.subr.mxu0 0.0
    %345 = vmatpush2.msra.mxu0 0.0
    %346 = vmatprep.subr.mxu0 0.0
    %347 = vmatpush2.msra.mxu0 0.0
    %348 = vmatprep.subr.mxu0 0.0
    %349 = vmatpush2.msra.mxu0 0.0
    %350 = vmatprep.subr.mxu0 0.0
    %351 = vmatpush2.msra.mxu0 0.0
    %352 = vmatprep.subr.mxu0 0.0
    %353 = vmatpush2.msra.mxu0 0.0
    %354 = vmatprep.subr.mxu0 0.0
    %355 = vmatpush2.msra.mxu0 0.0
    %356 = vmatprep.subr.mxu0 0.0
    %357 = vmatpush2.msra.mxu0 0.0
    %358 = vmatprep.subr.mxu0 0.0
    %359 = vmatpush2.msra.mxu0 0.0
    %360 = vmatprep.subr.mxu0 0.0
    %361 = vmatpush2.msra.mxu0 0.0
    %362 = vmatprep.mubr.f32.mxu0 0.0
    %363 = vmatmul.mubr.f32.gmra.mxu0 %v217
    %v364 = vpop.f32.mrf.mxu0
    %v365 = vadd.f32 %v208, %v364
    %v366 = vpop.f32.mrf.mxu0
    %v367 = vadd.f32 %v210, %v366
    %368 = vdwg.mxu0
    %v369 = vld [vmem:[#allocation3] sm:$0xff]
    %v370 = vld [vmem:[#allocation3 + $0x8] sm:$0xff]
    %v371 = vld [vmem:[#allocation3 + $0x10] sm:$0xf]
    %s372 = scalar_lea.vmem %s1, 2
    %v373 = vld [vmem:[%s372] sm:$0x1]
    %v377 = vcombine.high %v369, %v369
    %v378 = vcombine.high %v370, %v370
    %379 = vrot.lane.b32.xlu0 %v369, 126
    %v380 = vpop.permute.xlu0 %379
    %381 = vrot.lane.b32.xlu0 %v377, 126
    %v382 = vpop.permute.xlu0 %381
    %383 = vrot.lane.b32.xlu0 %v370, 126
    %v384 = vpop.permute.xlu0 %383
    %385 = vrot.lane.b32.xlu0 %v378, 126
    %v386 = vpop.permute.xlu0 %385
    %387 = vrot.lane.b32.xlu0 %v371, 126
    %v388 = vpop.permute.xlu0 %387
    %vm389 = vcmask 1031168
    %v390 = vsel %vm389, %v380, %v382
    %v391 = vsel %vm389, %v382, %v384
    %v392 = vsel %vm389, %v384, %v386
    %v393 = vsel %vm389, %v386, %v388
    %v395 = vsel %vm57, %v373, 0
    %v397 = vsel %vm61, %v390, 0
    %v399 = vsel %vm61, %v391, 0
    %v401 = vsel %vm61, %v392, 0
    %v403 = vsel %vm61, %v393, 0
    %405 = vmatprep.subr.mxu0 0.0
    %406 = vmatpush1.msra.mxu0 0.0
    %407 = vmatprep.subr.mxu0 0.0
    %408 = vmatpush1.msra.mxu0 0.0
    %409 = vmatprep.subr.mxu0 0.0
    %410 = vmatpush1.msra.mxu0 0.0
    %411 = vmatprep.subr.mxu0 0.0
    %412 = vmatpush1.msra.mxu0 0.0
    %413 = vmatprep.subr.mxu0 0.0
    %414 = vmatpush1.msra.mxu0 0.0
    %415 = vmatprep.subr.mxu0 0.0
    %416 = vmatpush1.msra.mxu0 0.0
    %417 = vmatprep.subr.mxu0 0.0
    %418 = vmatpush1.msra.mxu0 0.0
    %419 = vmatprep.subr.mxu0 0.0
    %420 = vmatpush1.msra.mxu0 0.0
    %421 = vmatprep.subr.mxu0 0.0
    %422 = vmatpush1.msra.mxu0 0.0
    %423 = vmatprep.subr.mxu0 0.0
    %424 = vmatpush1.msra.mxu0 0.0
    %425 = vmatprep.subr.mxu0 0.0
    %426 = vmatpush1.msra.mxu0 0.0
    %427 = vmatprep.subr.mxu0 0.0
    %428 = vmatpush1.msra.mxu0 0.0
    %429 = vmatprep.subr.mxu0 0.0
    %430 = vmatpush1.msra.mxu0 0.0
    %431 = vmatprep.subr.mxu0 0.0
    %432 = vmatpush1.msra.mxu0 0.0
    %433 = vmatprep.subr.mxu0 0.0
    %434 = vmatpush1.msra.mxu0 0.0
    %435 = vmatprep.subr.mxu0 %v399
    %436 = vmatpush1.msra.mxu0 %v397
    %437 = vmatprep.subr.mxu0 0.0
    %438 = vmatpush2.msra.mxu0 0.0
    %439 = vmatprep.subr.mxu0 0.0
    %440 = vmatpush2.msra.mxu0 0.0
    %441 = vmatprep.subr.mxu0 0.0
    %442 = vmatpush2.msra.mxu0 0.0
    %443 = vmatprep.subr.mxu0 0.0
    %444 = vmatpush2.msra.mxu0 0.0
    %445 = vmatprep.subr.mxu0 0.0
    %446 = vmatpush2.msra.mxu0 0.0
    %447 = vmatprep.subr.mxu0 0.0
    %448 = vmatpush2.msra.mxu0 0.0
    %449 = vmatprep.subr.mxu0 0.0
    %450 = vmatpush2.msra.mxu0 0.0
    %451 = vmatprep.subr.mxu0 0.0
    %452 = vmatpush2.msra.mxu0 0.0
    %453 = vmatprep.subr.mxu0 0.0
    %454 = vmatpush2.msra.mxu0 0.0
    %455 = vmatprep.subr.mxu0 0.0
    %456 = vmatpush2.msra.mxu0 0.0
    %457 = vmatprep.subr.mxu0 0.0
    %458 = vmatpush2.msra.mxu0 0.0
    %459 = vmatprep.subr.mxu0 0.0
    %460 = vmatpush2.msra.mxu0 0.0
    %461 = vmatprep.subr.mxu0 0.0
    %462 = vmatpush2.msra.mxu0 0.0
    %463 = vmatprep.subr.mxu0 0.0
    %464 = vmatpush2.msra.mxu0 0.0
    %465 = vmatprep.subr.mxu0 0.0
    %466 = vmatpush2.msra.mxu0 0.0
    %467 = vmatprep.subr.mxu0 0.0
    %468 = vmatpush2.msra.mxu0 0.0
    %469 = vmatprep.mubr.f32.mxu0 0.0
    %470 = vmatmul.mubr.f32.gmra.mxu0 %v395
    %v471 = vpop.f32.mrf.mxu0
    %v472 = vadd.f32 0.0, %v471
    %v473 = vpop.f32.mrf.mxu0
    %v474 = vadd.f32 0.0, %v473
    %475 = vdwg.mxu0
    %476 = vmatprep.subr.mxu0 0.0
    %477 = vmatpush1.msra.mxu0 0.0
    %478 = vmatprep.subr.mxu0 0.0
    %479 = vmatpush1.msra.mxu0 0.0
    %480 = vmatprep.subr.mxu0 0.0
    %481 = vmatpush1.msra.mxu0 0.0
    %482 = vmatprep.subr.mxu0 0.0
    %483 = vmatpush1.msra.mxu0 0.0
    %484 = vmatprep.subr.mxu0 0.0
    %485 = vmatpush1.msra.mxu0 0.0
    %486 = vmatprep.subr.mxu0 0.0
    %487 = vmatpush1.msra.mxu0 0.0
    %488 = vmatprep.subr.mxu0 0.0
    %489 = vmatpush1.msra.mxu0 0.0
    %490 = vmatprep.subr.mxu0 0.0
    %491 = vmatpush1.msra.mxu0 0.0
    %492 = vmatprep.subr.mxu0 0.0
    %493 = vmatpush1.msra.mxu0 0.0
    %494 = vmatprep.subr.mxu0 0.0
    %495 = vmatpush1.msra.mxu0 0.0
    %496 = vmatprep.subr.mxu0 0.0
    %497 = vmatpush1.msra.mxu0 0.0
    %498 = vmatprep.subr.mxu0 0.0
    %499 = vmatpush1.msra.mxu0 0.0
    %500 = vmatprep.subr.mxu0 0.0
    %501 = vmatpush1.msra.mxu0 0.0
    %502 = vmatprep.subr.mxu0 0.0
    %503 = vmatpush1.msra.mxu0 0.0
    %504 = vmatprep.subr.mxu0 0.0
    %505 = vmatpush1.msra.mxu0 0.0
    %506 = vmatprep.subr.mxu0 %v403
    %507 = vmatpush1.msra.mxu0 %v401
    %508 = vmatprep.subr.mxu0 0.0
    %509 = vmatpush2.msra.mxu0 0.0
    %510 = vmatprep.subr.mxu0 0.0
    %511 = vmatpush2.msra.mxu0 0.0
    %512 = vmatprep.subr.mxu0 0.0
    %513 = vmatpush2.msra.mxu0 0.0
    %514 = vmatprep.subr.mxu0 0.0
    %515 = vmatpush2.msra.mxu0 0.0
    %516 = vmatprep.subr.mxu0 0.0
    %517 = vmatpush2.msra.mxu0 0.0
    %518 = vmatprep.subr.mxu0 0.0
    %519 = vmatpush2.msra.mxu0 0.0
    %520 = vmatprep.subr.mxu0 0.0
    %521 = vmatpush2.msra.mxu0 0.0
    %522 = vmatprep.subr.mxu0 0.0
    %523 = vmatpush2.msra.mxu0 0.0
    %524 = vmatprep.subr.mxu0 0.0
    %525 = vmatpush2.msra.mxu0 0.0
    %526 = vmatprep.subr.mxu0 0.0
    %527 = vmatpush2.msra.mxu0 0.0
    %528 = vmatprep.subr.mxu0 0.0
    %529 = vmatpush2.msra.mxu0 0.0
    %530 = vmatprep.subr.mxu0 0.0
    %531 = vmatpush2.msra.mxu0 0.0
    %532 = vmatprep.subr.mxu0 0.0
    %533 = vmatpush2.msra.mxu0 0.0
    %534 = vmatprep.subr.mxu0 0.0
    %535 = vmatpush2.msra.mxu0 0.0
    %536 = vmatprep.subr.mxu0 0.0
    %537 = vmatpush2.msra.mxu0 0.0
    %538 = vmatprep.subr.mxu0 0.0
    %539 = vmatpush2.msra.mxu0 0.0
    %540 = vmatprep.mubr.f32.mxu0 0.0
    %541 = vmatmul.mubr.f32.gmra.mxu0 %v395
    %v542 = vpop.f32.mrf.mxu0
    %v543 = vadd.f32 0.0, %v542
    %v544 = vpop.f32.mrf.mxu0
    %v545 = vadd.f32 0.0, %v544
    %546 = vdwg.mxu0
    %v547 = vadd.f32 %v294, %v472
    %v548 = vadd.f32 %v296, %v474
    %v549 = vadd.f32 %v365, %v543
    %v550 = vadd.f32 %v367, %v545
    %v551 = vld [vmem:[#allocation3] sm:$0xff]
    %v552 = vld [vmem:[#allocation3 + $0x8] sm:$0xff]
    %v553 = vld [vmem:[#allocation3 + $0x10] sm:$0xf]
    %s554 = scalar_lea.vmem %s1, 3
    %v555 = vld [vmem:[%s554] sm:$0x1]
    %v559 = vcombine.high %v551, %v551
    %v560 = vcombine.high %v552, %v552
    %561 = vrot.lane.b32.xlu0 %v551, 112
    %v562 = vpop.permute.xlu0 %561
    %563 = vrot.lane.b32.xlu0 %v559, 112
    %v564 = vpop.permute.xlu0 %563
    %565 = vrot.lane.b32.xlu0 %v552, 112
    %v566 = vpop.permute.xlu0 %565
    %567 = vrot.lane.b32.xlu0 %v560, 112
    %v568 = vpop.permute.xlu0 %567
    %569 = vrot.lane.b32.xlu0 %v553, 112
    %v570 = vpop.permute.xlu0 %569
    %vm571 = vcmask 916480
    %v572 = vsel %vm571, %v562, %v564
    %v573 = vsel %vm571, %v564, %v566
    %v574 = vsel %vm571, %v566, %v568
    %v575 = vsel %vm571, %v568, %v570
    %v577 = vsel %vm57, %v555, 0
    %v579 = vsel %vm61, %v572, 0
    %v581 = vsel %vm61, %v573, 0
    %v583 = vsel %vm61, %v574, 0
    %v585 = vsel %vm61, %v575, 0
    %587 = vmatprep.subr.mxu0 0.0
    %588 = vmatpush1.msra.mxu0 0.0
    %589 = vmatprep.subr.mxu0 0.0
    %590 = vmatpush1.msra.mxu0 0.0
    %591 = vmatprep.subr.mxu0 0.0
    %592 = vmatpush1.msra.mxu0 0.0
    %593 = vmatprep.subr.mxu0 0.0
    %594 = vmatpush1.msra.mxu0 0.0
    %595 = vmatprep.subr.mxu0 0.0
    %596 = vmatpush1.msra.mxu0 0.0
    %597 = vmatprep.subr.mxu0 0.0
    %598 = vmatpush1.msra.mxu0 0.0
    %599 = vmatprep.subr.mxu0 0.0
    %600 = vmatpush1.msra.mxu0 0.0
    %601 = vmatprep.subr.mxu0 0.0
    %602 = vmatpush1.msra.mxu0 0.0
    %603 = vmatprep.subr.mxu0 0.0
    %604 = vmatpush1.msra.mxu0 0.0
    %605 = vmatprep.subr.mxu0 0.0
    %606 = vmatpush1.msra.mxu0 0.0
    %607 = vmatprep.subr.mxu0 0.0
    %608 = vmatpush1.msra.mxu0 0.0
    %609 = vmatprep.subr.mxu0 0.0
    %610 = vmatpush1.msra.mxu0 0.0
    %611 = vmatprep.subr.mxu0 0.0
    %612 = vmatpush1.msra.mxu0 0.0
    %613 = vmatprep.subr.mxu0 0.0
    %614 = vmatpush1.msra.mxu0 0.0
    %615 = vmatprep.subr.mxu0 0.0
    %616 = vmatpush1.msra.mxu0 0.0
    %617 = vmatprep.subr.mxu0 %v581
    %618 = vmatpush1.msra.mxu0 %v579
    %619 = vmatprep.subr.mxu0 0.0
    %620 = vmatpush2.msra.mxu0 0.0
    %621 = vmatprep.subr.mxu0 0.0
    %622 = vmatpush2.msra.mxu0 0.0
    %623 = vmatprep.subr.mxu0 0.0
    %624 = vmatpush2.msra.mxu0 0.0
    %625 = vmatprep.subr.mxu0 0.0
    %626 = vmatpush2.msra.mxu0 0.0
    %627 = vmatprep.subr.mxu0 0.0
    %628 = vmatpush2.msra.mxu0 0.0
    %629 = vmatprep.subr.mxu0 0.0
    %630 = vmatpush2.msra.mxu0 0.0
    %631 = vmatprep.subr.mxu0 0.0
    %632 = vmatpush2.msra.mxu0 0.0
    %633 = vmatprep.subr.mxu0 0.0
    %634 = vmatpush2.msra.mxu0 0.0
    %635 = vmatprep.subr.mxu0 0.0
    %636 = vmatpush2.msra.mxu0 0.0
    %637 = vmatprep.subr.mxu0 0.0
    %638 = vmatpush2.msra.mxu0 0.0
    %639 = vmatprep.subr.mxu0 0.0
    %640 = vmatpush2.msra.mxu0 0.0
    %641 = vmatprep.subr.mxu0 0.0
    %642 = vmatpush2.msra.mxu0 0.0
    %643 = vmatprep.subr.mxu0 0.0
    %644 = vmatpush2.msra.mxu0 0.0
    %645 = vmatprep.subr.mxu0 0.0
    %646 = vmatpush2.msra.mxu0 0.0
    %647 = vmatprep.subr.mxu0 0.0
    %648 = vmatpush2.msra.mxu0 0.0
    %649 = vmatprep.subr.mxu0 0.0
    %650 = vmatpush2.msra.mxu0 0.0
    %651 = vmatprep.mubr.f32.mxu0 0.0
    %652 = vmatmul.mubr.f32.gmra.mxu0 %v577
    %v653 = vpop.f32.mrf.mxu0
    %v654 = vadd.f32 0.0, %v653
    %v655 = vpop.f32.mrf.mxu0
    %v656 = vadd.f32 0.0, %v655
    %657 = vdwg.mxu0
    %658 = vmatprep.subr.mxu0 0.0
    %659 = vmatpush1.msra.mxu0 0.0
    %660 = vmatprep.subr.mxu0 0.0
    %661 = vmatpush1.msra.mxu0 0.0
    %662 = vmatprep.subr.mxu0 0.0
    %663 = vmatpush1.msra.mxu0 0.0
    %664 = vmatprep.subr.mxu0 0.0
    %665 = vmatpush1.msra.mxu0 0.0
    %666 = vmatprep.subr.mxu0 0.0
    %667 = vmatpush1.msra.mxu0 0.0
    %668 = vmatprep.subr.mxu0 0.0
    %669 = vmatpush1.msra.mxu0 0.0
    %670 = vmatprep.subr.mxu0 0.0
    %671 = vmatpush1.msra.mxu0 0.0
    %672 = vmatprep.subr.mxu0 0.0
    %673 = vmatpush1.msra.mxu0 0.0
    %674 = vmatprep.subr.mxu0 0.0
    %675 = vmatpush1.msra.mxu0 0.0
    %676 = vmatprep.subr.mxu0 0.0
    %677 = vmatpush1.msra.mxu0 0.0
    %678 = vmatprep.subr.mxu0 0.0
    %679 = vmatpush1.msra.mxu0 0.0
    %680 = vmatprep.subr.mxu0 0.0
    %681 = vmatpush1.msra.mxu0 0.0
    %682 = vmatprep.subr.mxu0 0.0
    %683 = vmatpush1.msra.mxu0 0.0
    %684 = vmatprep.subr.mxu0 0.0
    %685 = vmatpush1.msra.mxu0 0.0
    %686 = vmatprep.subr.mxu0 0.0
    %687 = vmatpush1.msra.mxu0 0.0
    %688 = vmatprep.subr.mxu0 %v585
    %689 = vmatpush1.msra.mxu0 %v583
    %690 = vmatprep.subr.mxu0 0.0
    %691 = vmatpush2.msra.mxu0 0.0
    %692 = vmatprep.subr.mxu0 0.0
    %693 = vmatpush2.msra.mxu0 0.0
    %694 = vmatprep.subr.mxu0 0.0
    %695 = vmatpush2.msra.mxu0 0.0
    %696 = vmatprep.subr.mxu0 0.0
    %697 = vmatpush2.msra.mxu0 0.0
    %698 = vmatprep.subr.mxu0 0.0
    %699 = vmatpush2.msra.mxu0 0.0
    %700 = vmatprep.subr.mxu0 0.0
    %701 = vmatpush2.msra.mxu0 0.0
    %702 = vmatprep.subr.mxu0 0.0
    %703 = vmatpush2.msra.mxu0 0.0
    %704 = vmatprep.subr.mxu0 0.0
    %705 = vmatpush2.msra.mxu0 0.0
    %706 = vmatprep.subr.mxu0 0.0
    %707 = vmatpush2.msra.mxu0 0.0
    %708 = vmatprep.subr.mxu0 0.0
    %709 = vmatpush2.msra.mxu0 0.0
    %710 = vmatprep.subr.mxu0 0.0
    %711 = vmatpush2.msra.mxu0 0.0
    %712 = vmatprep.subr.mxu0 0.0
    %713 = vmatpush2.msra.mxu0 0.0
    %714 = vmatprep.subr.mxu0 0.0
    %715 = vmatpush2.msra.mxu0 0.0
    %716 = vmatprep.subr.mxu0 0.0
    %717 = vmatpush2.msra.mxu0 0.0
    %718 = vmatprep.subr.mxu0 0.0
    %719 = vmatpush2.msra.mxu0 0.0
    %720 = vmatprep.subr.mxu0 0.0
    %721 = vmatpush2.msra.mxu0 0.0
    %722 = vmatprep.mubr.f32.mxu0 0.0
    %723 = vmatmul.mubr.f32.gmra.mxu0 %v577
    %v724 = vpop.f32.mrf.mxu0
    %v725 = vadd.f32 0.0, %v724
    %v726 = vpop.f32.mrf.mxu0
    %v727 = vadd.f32 0.0, %v726
    %728 = vdwg.mxu0
    %v729 = vadd.f32 %v547, %v654
    %v730 = vadd.f32 %v548, %v656
    %v731 = vadd.f32 %v549, %v725
    %v732 = vadd.f32 %v550, %v727
    %v733 = vld [vmem:[#allocation3] sm:$0xff]
    %v734 = vld [vmem:[#allocation3 + $0x8] sm:$0xff]
    %v735 = vld [vmem:[#allocation3 + $0x10] sm:$0xf]
    %s736 = scalar_lea.vmem %s1, 4
    %v737 = vld [vmem:[%s736] sm:$0x1]
    %v741 = vcombine.high %v733, %v733
    %v742 = vcombine.high %v734, %v734
    %743 = vrot.lane.b32.xlu0 %v733, 111
    %v744 = vpop.permute.xlu0 %743
    %745 = vrot.lane.b32.xlu0 %v741, 111
    %v746 = vpop.permute.xlu0 %745
    %747 = vrot.lane.b32.xlu0 %v734, 111
    %v748 = vpop.permute.xlu0 %747
    %749 = vrot.lane.b32.xlu0 %v742, 111
    %v750 = vpop.permute.xlu0 %749
    %751 = vrot.lane.b32.xlu0 %v735, 111
    %v752 = vpop.permute.xlu0 %751
    %vm753 = vcmask 908288
    %v754 = vsel %vm753, %v744, %v746
    %v755 = vsel %vm753, %v746, %v748
    %v756 = vsel %vm753, %v748, %v750
    %v757 = vsel %vm753, %v750, %v752
    %v759 = vsel %vm57, %v737, 0
    %v761 = vsel %vm61, %v754, 0
    %v763 = vsel %vm61, %v755, 0
    %v765 = vsel %vm61, %v756, 0
    %v767 = vsel %vm61, %v757, 0
    %769 = vmatprep.subr.mxu0 0.0
    %770 = vmatpush1.msra.mxu0 0.0
    %771 = vmatprep.subr.mxu0 0.0
    %772 = vmatpush1.msra.mxu0 0.0
    %773 = vmatprep.subr.mxu0 0.0
    %774 = vmatpush1.msra.mxu0 0.0
    %775 = vmatprep.subr.mxu0 0.0
    %776 = vmatpush1.msra.mxu0 0.0
    %777 = vmatprep.subr.mxu0 0.0
    %778 = vmatpush1.msra.mxu0 0.0
    %779 = vmatprep.subr.mxu0 0.0
    %780 = vmatpush1.msra.mxu0 0.0
    %781 = vmatprep.subr.mxu0 0.0
    %782 = vmatpush1.msra.mxu0 0.0
    %783 = vmatprep.subr.mxu0 0.0
    %784 = vmatpush1.msra.mxu0 0.0
    %785 = vmatprep.subr.mxu0 0.0
    %786 = vmatpush1.msra.mxu0 0.0
    %787 = vmatprep.subr.mxu0 0.0
    %788 = vmatpush1.msra.mxu0 0.0
    %789 = vmatprep.subr.mxu0 0.0
    %790 = vmatpush1.msra.mxu0 0.0
    %791 = vmatprep.subr.mxu0 0.0
    %792 = vmatpush1.msra.mxu0 0.0
    %793 = vmatprep.subr.mxu0 0.0
    %794 = vmatpush1.msra.mxu0 0.0
    %795 = vmatprep.subr.mxu0 0.0
    %796 = vmatpush1.msra.mxu0 0.0
    %797 = vmatprep.subr.mxu0 0.0
    %798 = vmatpush1.msra.mxu0 0.0
    %799 = vmatprep.subr.mxu0 %v763
    %800 = vmatpush1.msra.mxu0 %v761
    %801 = vmatprep.subr.mxu0 0.0
    %802 = vmatpush2.msra.mxu0 0.0
    %803 = vmatprep.subr.mxu0 0.0
    %804 = vmatpush2.msra.mxu0 0.0
    %805 = vmatprep.subr.mxu0 0.0
    %806 = vmatpush2.msra.mxu0 0.0
    %807 = vmatprep.subr.mxu0 0.0
    %808 = vmatpush2.msra.mxu0 0.0
    %809 = vmatprep.subr.mxu0 0.0
    %810 = vmatpush2.msra.mxu0 0.0
    %811 = vmatprep.subr.mxu0 0.0
    %812 = vmatpush2.msra.mxu0 0.0
    %813 = vmatprep.subr.mxu0 0.0
    %814 = vmatpush2.msra.mxu0 0.0
    %815 = vmatprep.subr.mxu0 0.0
    %816 = vmatpush2.msra.mxu0 0.0
    %817 = vmatprep.subr.mxu0 0.0
    %818 = vmatpush2.msra.mxu0 0.0
    %819 = vmatprep.subr.mxu0 0.0
    %820 = vmatpush2.msra.mxu0 0.0
    %821 = vmatprep.subr.mxu0 0.0
    %822 = vmatpush2.msra.mxu0 0.0
    %823 = vmatprep.subr.mxu0 0.0
    %824 = vmatpush2.msra.mxu0 0.0
    %825 = vmatprep.subr.mxu0 0.0
    %826 = vmatpush2.msra.mxu0 0.0
    %827 = vmatprep.subr.mxu0 0.0
    %828 = vmatpush2.msra.mxu0 0.0
    %829 = vmatprep.subr.mxu0 0.0
    %830 = vmatpush2.msra.mxu0 0.0
    %831 = vmatprep.subr.mxu0 0.0
    %832 = vmatpush2.msra.mxu0 0.0
    %833 = vmatprep.mubr.f32.mxu0 0.0
    %834 = vmatmul.mubr.f32.gmra.mxu0 %v759
    %v835 = vpop.f32.mrf.mxu0
    %v836 = vadd.f32 0.0, %v835
    %v837 = vpop.f32.mrf.mxu0
    %v838 = vadd.f32 0.0, %v837
    %839 = vdwg.mxu0
    %840 = vmatprep.subr.mxu0 0.0
    %841 = vmatpush1.msra.mxu0 0.0
    %842 = vmatprep.subr.mxu0 0.0
    %843 = vmatpush1.msra.mxu0 0.0
    %844 = vmatprep.subr.mxu0 0.0
    %845 = vmatpush1.msra.mxu0 0.0
    %846 = vmatprep.subr.mxu0 0.0
    %847 = vmatpush1.msra.mxu0 0.0
    %848 = vmatprep.subr.mxu0 0.0
    %849 = vmatpush1.msra.mxu0 0.0
    %850 = vmatprep.subr.mxu0 0.0
    %851 = vmatpush1.msra.mxu0 0.0
    %852 = vmatprep.subr.mxu0 0.0
    %853 = vmatpush1.msra.mxu0 0.0
    %854 = vmatprep.subr.mxu0 0.0
    %855 = vmatpush1.msra.mxu0 0.0
    %856 = vmatprep.subr.mxu0 0.0
    %857 = vmatpush1.msra.mxu0 0.0
    %858 = vmatprep.subr.mxu0 0.0
    %859 = vmatpush1.msra.mxu0 0.0
    %860 = vmatprep.subr.mxu0 0.0
    %861 = vmatpush1.msra.mxu0 0.0
    %862 = vmatprep.subr.mxu0 0.0
    %863 = vmatpush1.msra.mxu0 0.0
    %864 = vmatprep.subr.mxu0 0.0
    %865 = vmatpush1.msra.mxu0 0.0
    %866 = vmatprep.subr.mxu0 0.0
    %867 = vmatpush1.msra.mxu0 0.0
    %868 = vmatprep.subr.mxu0 0.0
    %869 = vmatpush1.msra.mxu0 0.0
    %870 = vmatprep.subr.mxu0 %v767
    %871 = vmatpush1.msra.mxu0 %v765
    %872 = vmatprep.subr.mxu0 0.0
    %873 = vmatpush2.msra.mxu0 0.0
    %874 = vmatprep.subr.mxu0 0.0
    %875 = vmatpush2.msra.mxu0 0.0
    %876 = vmatprep.subr.mxu0 0.0
    %877 = vmatpush2.msra.mxu0 0.0
    %878 = vmatprep.subr.mxu0 0.0
    %879 = vmatpush2.msra.mxu0 0.0
    %880 = vmatprep.subr.mxu0 0.0
    %881 = vmatpush2.msra.mxu0 0.0
    %882 = vmatprep.subr.mxu0 0.0
    %883 = vmatpush2.msra.mxu0 0.0
    %884 = vmatprep.subr.mxu0 0.0
    %885 = vmatpush2.msra.mxu0 0.0
    %886 = vmatprep.subr.mxu0 0.0
    %887 = vmatpush2.msra.mxu0 0.0
    %888 = vmatprep.subr.mxu0 0.0
    %889 = vmatpush2.msra.mxu0 0.0
    %890 = vmatprep.subr.mxu0 0.0
    %891 = vmatpush2.msra.mxu0 0.0
    %892 = vmatprep.subr.mxu0 0.0
    %893 = vmatpush2.msra.mxu0 0.0
    %894 = vmatprep.subr.mxu0 0.0
    %895 = vmatpush2.msra.mxu0 0.0
    %896 = vmatprep.subr.mxu0 0.0
    %897 = vmatpush2.msra.mxu0 0.0
    %898 = vmatprep.subr.mxu0 0.0
    %899 = vmatpush2.msra.mxu0 0.0
    %900 = vmatprep.subr.mxu0 0.0
    %901 = vmatpush2.msra.mxu0 0.0
    %902 = vmatprep.subr.mxu0 0.0
    %903 = vmatpush2.msra.mxu0 0.0
    %904 = vmatprep.mubr.f32.mxu0 0.0
    %905 = vmatmul.mubr.f32.gmra.mxu0 %v759
    %v906 = vpop.f32.mrf.mxu0
    %v907 = vadd.f32 0.0, %v906
    %v908 = vpop.f32.mrf.mxu0
    %v909 = vadd.f32 0.0, %v908
    %910 = vdwg.mxu0
    %v911 = vadd.f32 %v729, %v836
    %v912 = vadd.f32 %v730, %v838
    %v913 = vadd.f32 %v731, %v907
    %v914 = vadd.f32 %v732, %v909
    %v915 = vld [vmem:[#allocation3] sm:$0xff]
    %v916 = vld [vmem:[#allocation3 + $0x8] sm:$0xff]
    %v917 = vld [vmem:[#allocation3 + $0x10] sm:$0xf]
    %s918 = scalar_lea.vmem %s1, 5
    %v919 = vld [vmem:[%s918] sm:$0x1]
    %v923 = vcombine.high %v915, %v915
    %v924 = vcombine.high %v916, %v916
    %925 = vrot.lane.b32.xlu0 %v915, 110
    %v926 = vpop.permute.xlu0 %925
    %927 = vrot.lane.b32.xlu0 %v923, 110
    %v928 = vpop.permute.xlu0 %927
    %929 = vrot.lane.b32.xlu0 %v916, 110
    %v930 = vpop.permute.xlu0 %929
    %931 = vrot.lane.b32.xlu0 %v924, 110
    %v932 = vpop.permute.xlu0 %931
    %933 = vrot.lane.b32.xlu0 %v917, 110
    %v934 = vpop.permute.xlu0 %933
    %vm935 = vcmask 900096
    %v936 = vsel %vm935, %v926, %v928
    %v937 = vsel %vm935, %v928, %v930
    %v938 = vsel %vm935, %v930, %v932
    %v939 = vsel %vm935, %v932, %v934
    %v941 = vsel %vm57, %v919, 0
    %v943 = vsel %vm61, %v936, 0
    %v945 = vsel %vm61, %v937, 0
    %v947 = vsel %vm61, %v938, 0
    %v949 = vsel %vm61, %v939, 0
    %951 = vmatprep.subr.mxu0 0.0
    %952 = vmatpush1.msra.mxu0 0.0
    %953 = vmatprep.subr.mxu0 0.0
    %954 = vmatpush1.msra.mxu0 0.0
    %955 = vmatprep.subr.mxu0 0.0
    %956 = vmatpush1.msra.mxu0 0.0
    %957 = vmatprep.subr.mxu0 0.0
    %958 = vmatpush1.msra.mxu0 0.0
    %959 = vmatprep.subr.mxu0 0.0
    %960 = vmatpush1.msra.mxu0 0.0
    %961 = vmatprep.subr.mxu0 0.0
    %962 = vmatpush1.msra.mxu0 0.0
    %963 = vmatprep.subr.mxu0 0.0
    %964 = vmatpush1.msra.mxu0 0.0
    %965 = vmatprep.subr.mxu0 0.0
    %966 = vmatpush1.msra.mxu0 0.0
    %967 = vmatprep.subr.mxu0 0.0
    %968 = vmatpush1.msra.mxu0 0.0
    %969 = vmatprep.subr.mxu0 0.0
    %970 = vmatpush1.msra.mxu0 0.0
    %971 = vmatprep.subr.mxu0 0.0
    %972 = vmatpush1.msra.mxu0 0.0
    %973 = vmatprep.subr.mxu0 0.0
    %974 = vmatpush1.msra.mxu0 0.0
    %975 = vmatprep.subr.mxu0 0.0
    %976 = vmatpush1.msra.mxu0 0.0
    %977 = vmatprep.subr.mxu0 0.0
    %978 = vmatpush1.msra.mxu0 0.0
    %979 = vmatprep.subr.mxu0 0.0
    %980 = vmatpush1.msra.mxu0 0.0
    %981 = vmatprep.subr.mxu0 %v945
    %982 = vmatpush1.msra.mxu0 %v943
    %983 = vmatprep.subr.mxu0 0.0
    %984 = vmatpush2.msra.mxu0 0.0
    %985 = vmatprep.subr.mxu0 0.0
    %986 = vmatpush2.msra.mxu0 0.0
    %987 = vmatprep.subr.mxu0 0.0
    %988 = vmatpush2.msra.mxu0 0.0
    %989 = vmatprep.subr.mxu0 0.0
    %990 = vmatpush2.msra.mxu0 0.0
    %991 = vmatprep.subr.mxu0 0.0
    %992 = vmatpush2.msra.mxu0 0.0
    %993 = vmatprep.subr.mxu0 0.0
    %994 = vmatpush2.msra.mxu0 0.0
    %995 = vmatprep.subr.mxu0 0.0
    %996 = vmatpush2.msra.mxu0 0.0
    %997 = vmatprep.subr.mxu0 0.0
    %998 = vmatpush2.msra.mxu0 0.0
    %999 = vmatprep.subr.mxu0 0.0
    %1000 = vmatpush2.msra.mxu0 0.0
    %1001 = vmatprep.subr.mxu0 0.0
    %1002 = vmatpush2.msra.mxu0 0.0
    %1003 = vmatprep.subr.mxu0 0.0
    %1004 = vmatpush2.msra.mxu0 0.0
    %1005 = vmatprep.subr.mxu0 0.0
    %1006 = vmatpush2.msra.mxu0 0.0
    %1007 = vmatprep.subr.mxu0 0.0
    %1008 = vmatpush2.msra.mxu0 0.0
    %1009 = vmatprep.subr.mxu0 0.0
    %1010 = vmatpush2.msra.mxu0 0.0
    %1011 = vmatprep.subr.mxu0 0.0
    %1012 = vmatpush2.msra.mxu0 0.0
    %1013 = vmatprep.subr.mxu0 0.0
    %1014 = vmatpush2.msra.mxu0 0.0
    %1015 = vmatprep.mubr.f32.mxu0 0.0
    %1016 = vmatmul.mubr.f32.gmra.mxu0 %v941
    %v1017 = vpop.f32.mrf.mxu0
    %v1018 = vadd.f32 0.0, %v1017
    %v1019 = vpop.f32.mrf.mxu0
    %v1020 = vadd.f32 0.0, %v1019
    %1021 = vdwg.mxu0
    %1022 = vmatprep.subr.mxu0 0.0
    %1023 = vmatpush1.msra.mxu0 0.0
    %1024 = vmatprep.subr.mxu0 0.0
    %1025 = vmatpush1.msra.mxu0 0.0
    %1026 = vmatprep.subr.mxu0 0.0
    %1027 = vmatpush1.msra.mxu0 0.0
    %1028 = vmatprep.subr.mxu0 0.0
    %1029 = vmatpush1.msra.mxu0 0.0
    %1030 = vmatprep.subr.mxu0 0.0
    %1031 = vmatpush1.msra.mxu0 0.0
    %1032 = vmatprep.subr.mxu0 0.0
    %1033 = vmatpush1.msra.mxu0 0.0
    %1034 = vmatprep.subr.mxu0 0.0
    %1035 = vmatpush1.msra.mxu0 0.0
    %1036 = vmatprep.subr.mxu0 0.0
    %1037 = vmatpush1.msra.mxu0 0.0
    %1038 = vmatprep.subr.mxu0 0.0
    %1039 = vmatpush1.msra.mxu0 0.0
    %1040 = vmatprep.subr.mxu0 0.0
    %1041 = vmatpush1.msra.mxu0 0.0
    %1042 = vmatprep.subr.mxu0 0.0
    %1043 = vmatpush1.msra.mxu0 0.0
    %1044 = vmatprep.subr.mxu0 0.0
    %1045 = vmatpush1.msra.mxu0 0.0
    %1046 = vmatprep.subr.mxu0 0.0
    %1047 = vmatpush1.msra.mxu0 0.0
    %1048 = vmatprep.subr.mxu0 0.0
    %1049 = vmatpush1.msra.mxu0 0.0
    %1050 = vmatprep.subr.mxu0 0.0
    %1051 = vmatpush1.msra.mxu0 0.0
    %1052 = vmatprep.subr.mxu0 %v949
    %1053 = vmatpush1.msra.mxu0 %v947
    %1054 = vmatprep.subr.mxu0 0.0
    %1055 = vmatpush2.msra.mxu0 0.0
    %1056 = vmatprep.subr.mxu0 0.0
    %1057 = vmatpush2.msra.mxu0 0.0
    %1058 = vmatprep.subr.mxu0 0.0
    %1059 = vmatpush2.msra.mxu0 0.0
    %1060 = vmatprep.subr.mxu0 0.0
    %1061 = vmatpush2.msra.mxu0 0.0
    %1062 = vmatprep.subr.mxu0 0.0
    %1063 = vmatpush2.msra.mxu0 0.0
    %1064 = vmatprep.subr.mxu0 0.0
    %1065 = vmatpush2.msra.mxu0 0.0
    %1066 = vmatprep.subr.mxu0 0.0
    %1067 = vmatpush2.msra.mxu0 0.0
    %1068 = vmatprep.subr.mxu0 0.0
    %1069 = vmatpush2.msra.mxu0 0.0
    %1070 = vmatprep.subr.mxu0 0.0
    %1071 = vmatpush2.msra.mxu0 0.0
    %1072 = vmatprep.subr.mxu0 0.0
    %1073 = vmatpush2.msra.mxu0 0.0
    %1074 = vmatprep.subr.mxu0 0.0
    %1075 = vmatpush2.msra.mxu0 0.0
    %1076 = vmatprep.subr.mxu0 0.0
    %1077 = vmatpush2.msra.mxu0 0.0
    %1078 = vmatprep.subr.mxu0 0.0
    %1079 = vmatpush2.msra.mxu0 0.0
    %1080 = vmatprep.subr.mxu0 0.0
    %1081 = vmatpush2.msra.mxu0 0.0
    %1082 = vmatprep.subr.mxu0 0.0
    %1083 = vmatpush2.msra.mxu0 0.0
    %1084 = vmatprep.subr.mxu0 0.0
    %1085 = vmatpush2.msra.mxu0 0.0
    %1086 = vmatprep.mubr.f32.mxu0 0.0
    %1087 = vmatmul.mubr.f32.gmra.mxu0 %v941
    %v1088 = vpop.f32.mrf.mxu0
    %v1089 = vadd.f32 0.0, %v1088
    %v1090 = vpop.f32.mrf.mxu0
    %v1091 = vadd.f32 0.0, %v1090
    %1092 = vdwg.mxu0
    %v1093 = vadd.f32 %v911, %v1018
    %v1094 = vadd.f32 %v912, %v1020
    %v1095 = vadd.f32 %v913, %v1089
    %v1096 = vadd.f32 %v914, %v1091
    %v1097 = vld [vmem:[#allocation3] sm:$0xff]
    %v1098 = vld [vmem:[#allocation3 + $0x8] sm:$0xff]
    %v1099 = vld [vmem:[#allocation3 + $0x10] sm:$0xf]
    %s1100 = scalar_lea.vmem %s1, 6
    %v1101 = vld [vmem:[%s1100] sm:$0x1]
    %v1105 = vcombine.high %v1097, %v1097
    %v1106 = vcombine.high %v1098, %v1098
    %1107 = vrot.lane.b32.xlu0 %v1097, 96
    %v1108 = vpop.permute.xlu0 %1107
    %1109 = vrot.lane.b32.xlu0 %v1105, 96
    %v1110 = vpop.permute.xlu0 %1109
    %1111 = vrot.lane.b32.xlu0 %v1098, 96
    %v1112 = vpop.permute.xlu0 %1111
    %1113 = vrot.lane.b32.xlu0 %v1106, 96
    %v1114 = vpop.permute.xlu0 %1113
    %1115 = vrot.lane.b32.xlu0 %v1099, 96
    %v1116 = vpop.permute.xlu0 %1115
    %vm1117 = vcmask 785408
    %v1118 = vsel %vm1117, %v1108, %v1110
    %v1119 = vsel %vm1117, %v1110, %v1112
    %v1120 = vsel %vm1117, %v1112, %v1114
    %v1121 = vsel %vm1117, %v1114, %v1116
    %v1123 = vsel %vm57, %v1101, 0
    %v1125 = vsel %vm61, %v1118, 0
    %v1127 = vsel %vm61, %v1119, 0
    %v1129 = vsel %vm61, %v1120, 0
    %v1131 = vsel %vm61, %v1121, 0
    %1133 = vmatprep.subr.mxu0 0.0
    %1134 = vmatpush1.msra.mxu0 0.0
    %1135 = vmatprep.subr.mxu0 0.0
    %1136 = vmatpush1.msra.mxu0 0.0
    %1137 = vmatprep.subr.mxu0 0.0
    %1138 = vmatpush1.msra.mxu0 0.0
    %1139 = vmatprep.subr.mxu0 0.0
    %1140 = vmatpush1.msra.mxu0 0.0
    %1141 = vmatprep.subr.mxu0 0.0
    %1142 = vmatpush1.msra.mxu0 0.0
    %1143 = vmatprep.subr.mxu0 0.0
    %1144 = vmatpush1.msra.mxu0 0.0
    %1145 = vmatprep.subr.mxu0 0.0
    %1146 = vmatpush1.msra.mxu0 0.0
    %1147 = vmatprep.subr.mxu0 0.0
    %1148 = vmatpush1.msra.mxu0 0.0
    %1149 = vmatprep.subr.mxu0 0.0
    %1150 = vmatpush1.msra.mxu0 0.0
    %1151 = vmatprep.subr.mxu0 0.0
    %1152 = vmatpush1.msra.mxu0 0.0
    %1153 = vmatprep.subr.mxu0 0.0
    %1154 = vmatpush1.msra.mxu0 0.0
    %1155 = vmatprep.subr.mxu0 0.0
    %1156 = vmatpush1.msra.mxu0 0.0
    %1157 = vmatprep.subr.mxu0 0.0
    %1158 = vmatpush1.msra.mxu0 0.0
    %1159 = vmatprep.subr.mxu0 0.0
    %1160 = vmatpush1.msra.mxu0 0.0
    %1161 = vmatprep.subr.mxu0 0.0
    %1162 = vmatpush1.msra.mxu0 0.0
    %1163 = vmatprep.subr.mxu0 %v1127
    %1164 = vmatpush1.msra.mxu0 %v1125
    %1165 = vmatprep.subr.mxu0 0.0
    %1166 = vmatpush2.msra.mxu0 0.0
    %1167 = vmatprep.subr.mxu0 0.0
    %1168 = vmatpush2.msra.mxu0 0.0
    %1169 = vmatprep.subr.mxu0 0.0
    %1170 = vmatpush2.msra.mxu0 0.0
    %1171 = vmatprep.subr.mxu0 0.0
    %1172 = vmatpush2.msra.mxu0 0.0
    %1173 = vmatprep.subr.mxu0 0.0
    %1174 = vmatpush2.msra.mxu0 0.0
    %1175 = vmatprep.subr.mxu0 0.0
    %1176 = vmatpush2.msra.mxu0 0.0
    %1177 = vmatprep.subr.mxu0 0.0
    %1178 = vmatpush2.msra.mxu0 0.0
    %1179 = vmatprep.subr.mxu0 0.0
    %1180 = vmatpush2.msra.mxu0 0.0
    %1181 = vmatprep.subr.mxu0 0.0
    %1182 = vmatpush2.msra.mxu0 0.0
    %1183 = vmatprep.subr.mxu0 0.0
    %1184 = vmatpush2.msra.mxu0 0.0
    %1185 = vmatprep.subr.mxu0 0.0
    %1186 = vmatpush2.msra.mxu0 0.0
    %1187 = vmatprep.subr.mxu0 0.0
    %1188 = vmatpush2.msra.mxu0 0.0
    %1189 = vmatprep.subr.mxu0 0.0
    %1190 = vmatpush2.msra.mxu0 0.0
    %1191 = vmatprep.subr.mxu0 0.0
    %1192 = vmatpush2.msra.mxu0 0.0
    %1193 = vmatprep.subr.mxu0 0.0
    %1194 = vmatpush2.msra.mxu0 0.0
    %1195 = vmatprep.subr.mxu0 0.0
    %1196 = vmatpush2.msra.mxu0 0.0
    %1197 = vmatprep.mubr.f32.mxu0 0.0
    %1198 = vmatmul.mubr.f32.gmra.mxu0 %v1123
    %v1199 = vpop.f32.mrf.mxu0
    %v1200 = vadd.f32 0.0, %v1199
    %v1201 = vpop.f32.mrf.mxu0
    %v1202 = vadd.f32 0.0, %v1201
    %1203 = vdwg.mxu0
    %1204 = vmatprep.subr.mxu0 0.0
    %1205 = vmatpush1.msra.mxu0 0.0
    %1206 = vmatprep.subr.mxu0 0.0
    %1207 = vmatpush1.msra.mxu0 0.0
    %1208 = vmatprep.subr.mxu0 0.0
    %1209 = vmatpush1.msra.mxu0 0.0
    %1210 = vmatprep.subr.mxu0 0.0
    %1211 = vmatpush1.msra.mxu0 0.0
    %1212 = vmatprep.subr.mxu0 0.0
    %1213 = vmatpush1.msra.mxu0 0.0
    %1214 = vmatprep.subr.mxu0 0.0
    %1215 = vmatpush1.msra.mxu0 0.0
    %1216 = vmatprep.subr.mxu0 0.0
    %1217 = vmatpush1.msra.mxu0 0.0
    %1218 = vmatprep.subr.mxu0 0.0
    %1219 = vmatpush1.msra.mxu0 0.0
    %1220 = vmatprep.subr.mxu0 0.0
    %1221 = vmatpush1.msra.mxu0 0.0
    %1222 = vmatprep.subr.mxu0 0.0
    %1223 = vmatpush1.msra.mxu0 0.0
    %1224 = vmatprep.subr.mxu0 0.0
    %1225 = vmatpush1.msra.mxu0 0.0
    %1226 = vmatprep.subr.mxu0 0.0
    %1227 = vmatpush1.msra.mxu0 0.0
    %1228 = vmatprep.subr.mxu0 0.0
    %1229 = vmatpush1.msra.mxu0 0.0
    %1230 = vmatprep.subr.mxu0 0.0
    %1231 = vmatpush1.msra.mxu0 0.0
    %1232 = vmatprep.subr.mxu0 0.0
    %1233 = vmatpush1.msra.mxu0 0.0
    %1234 = vmatprep.subr.mxu0 %v1131
    %1235 = vmatpush1.msra.mxu0 %v1129
    %1236 = vmatprep.subr.mxu0 0.0
    %1237 = vmatpush2.msra.mxu0 0.0
    %1238 = vmatprep.subr.mxu0 0.0
    %1239 = vmatpush2.msra.mxu0 0.0
    %1240 = vmatprep.subr.mxu0 0.0
    %1241 = vmatpush2.msra.mxu0 0.0
    %1242 = vmatprep.subr.mxu0 0.0
    %1243 = vmatpush2.msra.mxu0 0.0
    %1244 = vmatprep.subr.mxu0 0.0
    %1245 = vmatpush2.msra.mxu0 0.0
    %1246 = vmatprep.subr.mxu0 0.0
    %1247 = vmatpush2.msra.mxu0 0.0
    %1248 = vmatprep.subr.mxu0 0.0
    %1249 = vmatpush2.msra.mxu0 0.0
    %1250 = vmatprep.subr.mxu0 0.0
    %1251 = vmatpush2.msra.mxu0 0.0
    %1252 = vmatprep.subr.mxu0 0.0
    %1253 = vmatpush2.msra.mxu0 0.0
    %1254 = vmatprep.subr.mxu0 0.0
    %1255 = vmatpush2.msra.mxu0 0.0
    %1256 = vmatprep.subr.mxu0 0.0
    %1257 = vmatpush2.msra.mxu0 0.0
    %1258 = vmatprep.subr.mxu0 0.0
    %1259 = vmatpush2.msra.mxu0 0.0
    %1260 = vmatprep.subr.mxu0 0.0
    %1261 = vmatpush2.msra.mxu0 0.0
    %1262 = vmatprep.subr.mxu0 0.0
    %1263 = vmatpush2.msra.mxu0 0.0
    %1264 = vmatprep.subr.mxu0 0.0
    %1265 = vmatpush2.msra.mxu0 0.0
    %1266 = vmatprep.subr.mxu0 0.0
    %1267 = vmatpush2.msra.mxu0 0.0
    %1268 = vmatprep.mubr.f32.mxu0 0.0
    %1269 = vmatmul.mubr.f32.gmra.mxu0 %v1123
    %v1270 = vpop.f32.mrf.mxu0
    %v1271 = vadd.f32 0.0, %v1270
    %v1272 = vpop.f32.mrf.mxu0
    %v1273 = vadd.f32 0.0, %v1272
    %1274 = vdwg.mxu0
    %v1275 = vadd.f32 %v1093, %v1200
    %v1276 = vadd.f32 %v1094, %v1202
    %v1277 = vadd.f32 %v1095, %v1271
    %v1278 = vadd.f32 %v1096, %v1273
    %v1279 = vld [vmem:[#allocation3] sm:$0xff]
    %v1280 = vld [vmem:[#allocation3 + $0x8] sm:$0xff]
    %v1281 = vld [vmem:[#allocation3 + $0x10] sm:$0xf]
    %s1282 = scalar_lea.vmem %s1, 7
    %v1283 = vld [vmem:[%s1282] sm:$0x1]
    %v1287 = vcombine.high %v1279, %v1279
    %v1288 = vcombine.high %v1280, %v1280
    %1289 = vrot.lane.b32.xlu0 %v1279, 95
    %v1290 = vpop.permute.xlu0 %1289
    %1291 = vrot.lane.b32.xlu0 %v1287, 95
    %v1292 = vpop.permute.xlu0 %1291
    %1293 = vrot.lane.b32.xlu0 %v1280, 95
    %v1294 = vpop.permute.xlu0 %1293
    %1295 = vrot.lane.b32.xlu0 %v1288, 95
    %v1296 = vpop.permute.xlu0 %1295
    %1297 = vrot.lane.b32.xlu0 %v1281, 95
    %v1298 = vpop.permute.xlu0 %1297
    %vm1299 = vcmask 777216
    %v1300 = vsel %vm1299, %v1290, %v1292
    %v1301 = vsel %vm1299, %v1292, %v1294
    %v1302 = vsel %vm1299, %v1294, %v1296
    %v1303 = vsel %vm1299, %v1296, %v1298
    %v1305 = vsel %vm57, %v1283, 0
    %v1307 = vsel %vm61, %v1300, 0
    %v1309 = vsel %vm61, %v1301, 0
    %v1311 = vsel %vm61, %v1302, 0
    %v1313 = vsel %vm61, %v1303, 0
    %1315 = vmatprep.subr.mxu0 0.0
    %1316 = vmatpush1.msra.mxu0 0.0
    %1317 = vmatprep.subr.mxu0 0.0
    %1318 = vmatpush1.msra.mxu0 0.0
    %1319 = vmatprep.subr.mxu0 0.0
    %1320 = vmatpush1.msra.mxu0 0.0
    %1321 = vmatprep.subr.mxu0 0.0
    %1322 = vmatpush1.msra.mxu0 0.0
    %1323 = vmatprep.subr.mxu0 0.0
    %1324 = vmatpush1.msra.mxu0 0.0
    %1325 = vmatprep.subr.mxu0 0.0
    %1326 = vmatpush1.msra.mxu0 0.0
    %1327 = vmatprep.subr.mxu0 0.0
    %1328 = vmatpush1.msra.mxu0 0.0
    %1329 = vmatprep.subr.mxu0 0.0
    %1330 = vmatpush1.msra.mxu0 0.0
    %1331 = vmatprep.subr.mxu0 0.0
    %1332 = vmatpush1.msra.mxu0 0.0
    %1333 = vmatprep.subr.mxu0 0.0
    %1334 = vmatpush1.msra.mxu0 0.0
    %1335 = vmatprep.subr.mxu0 0.0
    %1336 = vmatpush1.msra.mxu0 0.0
    %1337 = vmatprep.subr.mxu0 0.0
    %1338 = vmatpush1.msra.mxu0 0.0
    %1339 = vmatprep.subr.mxu0 0.0
    %1340 = vmatpush1.msra.mxu0 0.0
    %1341 = vmatprep.subr.mxu0 0.0
    %1342 = vmatpush1.msra.mxu0 0.0
    %1343 = vmatprep.subr.mxu0 0.0
    %1344 = vmatpush1.msra.mxu0 0.0
    %1345 = vmatprep.subr.mxu0 %v1309
    %1346 = vmatpush1.msra.mxu0 %v1307
    %1347 = vmatprep.subr.mxu0 0.0
    %1348 = vmatpush2.msra.mxu0 0.0
    %1349 = vmatprep.subr.mxu0 0.0
    %1350 = vmatpush2.msra.mxu0 0.0
    %1351 = vmatprep.subr.mxu0 0.0
    %1352 = vmatpush2.msra.mxu0 0.0
    %1353 = vmatprep.subr.mxu0 0.0
    %1354 = vmatpush2.msra.mxu0 0.0
    %1355 = vmatprep.subr.mxu0 0.0
    %1356 = vmatpush2.msra.mxu0 0.0
    %1357 = vmatprep.subr.mxu0 0.0
    %1358 = vmatpush2.msra.mxu0 0.0
    %1359 = vmatprep.subr.mxu0 0.0
    %1360 = vmatpush2.msra.mxu0 0.0
    %1361 = vmatprep.subr.mxu0 0.0
    %1362 = vmatpush2.msra.mxu0 0.0
    %1363 = vmatprep.subr.mxu0 0.0
    %1364 = vmatpush2.msra.mxu0 0.0
    %1365 = vmatprep.subr.mxu0 0.0
    %1366 = vmatpush2.msra.mxu0 0.0
    %1367 = vmatprep.subr.mxu0 0.0
    %1368 = vmatpush2.msra.mxu0 0.0
    %1369 = vmatprep.subr.mxu0 0.0
    %1370 = vmatpush2.msra.mxu0 0.0
    %1371 = vmatprep.subr.mxu0 0.0
    %1372 = vmatpush2.msra.mxu0 0.0
    %1373 = vmatprep.subr.mxu0 0.0
    %1374 = vmatpush2.msra.mxu0 0.0
    %1375 = vmatprep.subr.mxu0 0.0
    %1376 = vmatpush2.msra.mxu0 0.0
    %1377 = vmatprep.subr.mxu0 0.0
    %1378 = vmatpush2.msra.mxu0 0.0
    %1379 = vmatprep.mubr.f32.mxu0 0.0
    %1380 = vmatmul.mubr.f32.gmra.mxu0 %v1305
    %v1381 = vpop.f32.mrf.mxu0
    %v1382 = vadd.f32 0.0, %v1381
    %v1383 = vpop.f32.mrf.mxu0
    %v1384 = vadd.f32 0.0, %v1383
    %1385 = vdwg.mxu0
    %1386 = vmatprep.subr.mxu0 0.0
    %1387 = vmatpush1.msra.mxu0 0.0
    %1388 = vmatprep.subr.mxu0 0.0
    %1389 = vmatpush1.msra.mxu0 0.0
    %1390 = vmatprep.subr.mxu0 0.0
    %1391 = vmatpush1.msra.mxu0 0.0
    %1392 = vmatprep.subr.mxu0 0.0
    %1393 = vmatpush1.msra.mxu0 0.0
    %1394 = vmatprep.subr.mxu0 0.0
    %1395 = vmatpush1.msra.mxu0 0.0
    %1396 = vmatprep.subr.mxu0 0.0
    %1397 = vmatpush1.msra.mxu0 0.0
    %1398 = vmatprep.subr.mxu0 0.0
    %1399 = vmatpush1.msra.mxu0 0.0
    %1400 = vmatprep.subr.mxu0 0.0
    %1401 = vmatpush1.msra.mxu0 0.0
    %1402 = vmatprep.subr.mxu0 0.0
    %1403 = vmatpush1.msra.mxu0 0.0
    %1404 = vmatprep.subr.mxu0 0.0
    %1405 = vmatpush1.msra.mxu0 0.0
    %1406 = vmatprep.subr.mxu0 0.0
    %1407 = vmatpush1.msra.mxu0 0.0
    %1408 = vmatprep.subr.mxu0 0.0
    %1409 = vmatpush1.msra.mxu0 0.0
    %1410 = vmatprep.subr.mxu0 0.0
    %1411 = vmatpush1.msra.mxu0 0.0
    %1412 = vmatprep.subr.mxu0 0.0
    %1413 = vmatpush1.msra.mxu0 0.0
    %1414 = vmatprep.subr.mxu0 0.0
    %1415 = vmatpush1.msra.mxu0 0.0
    %1416 = vmatprep.subr.mxu0 %v1313
    %1417 = vmatpush1.msra.mxu0 %v1311
    %1418 = vmatprep.subr.mxu0 0.0
    %1419 = vmatpush2.msra.mxu0 0.0
    %1420 = vmatprep.subr.mxu0 0.0
    %1421 = vmatpush2.msra.mxu0 0.0
    %1422 = vmatprep.subr.mxu0 0.0
    %1423 = vmatpush2.msra.mxu0 0.0
    %1424 = vmatprep.subr.mxu0 0.0
    %1425 = vmatpush2.msra.mxu0 0.0
    %1426 = vmatprep.subr.mxu0 0.0
    %1427 = vmatpush2.msra.mxu0 0.0
    %1428 = vmatprep.subr.mxu0 0.0
    %1429 = vmatpush2.msra.mxu0 0.0
    %1430 = vmatprep.subr.mxu0 0.0
    %1431 = vmatpush2.msra.mxu0 0.0
    %1432 = vmatprep.subr.mxu0 0.0
    %1433 = vmatpush2.msra.mxu0 0.0
    %1434 = vmatprep.subr.mxu0 0.0
    %1435 = vmatpush2.msra.mxu0 0.0
    %1436 = vmatprep.subr.mxu0 0.0
    %1437 = vmatpush2.msra.mxu0 0.0
    %1438 = vmatprep.subr.mxu0 0.0
    %1439 = vmatpush2.msra.mxu0 0.0
    %1440 = vmatprep.subr.mxu0 0.0
    %1441 = vmatpush2.msra.mxu0 0.0
    %1442 = vmatprep.subr.mxu0 0.0
    %1443 = vmatpush2.msra.mxu0 0.0
    %1444 = vmatprep.subr.mxu0 0.0
    %1445 = vmatpush2.msra.mxu0 0.0
    %1446 = vmatprep.subr.mxu0 0.0
    %1447 = vmatpush2.msra.mxu0 0.0
    %1448 = vmatprep.subr.mxu0 0.0
    %1449 = vmatpush2.msra.mxu0 0.0
    %1450 = vmatprep.mubr.f32.mxu0 0.0
    %1451 = vmatmul.mubr.f32.gmra.mxu0 %v1305
    %v1452 = vpop.f32.mrf.mxu0
    %v1453 = vadd.f32 0.0, %v1452
    %v1454 = vpop.f32.mrf.mxu0
    %v1455 = vadd.f32 0.0, %v1454
    %1456 = vdwg.mxu0
    %v1457 = vadd.f32 %v1275, %v1382
    %v1458 = vadd.f32 %v1276, %v1384
    %v1459 = vadd.f32 %v1277, %v1453
    %v1460 = vadd.f32 %v1278, %v1455
    %v1461 = vld [vmem:[#allocation3] sm:$0xff]
    %v1462 = vld [vmem:[#allocation3 + $0x8] sm:$0xff]
    %v1463 = vld [vmem:[#allocation3 + $0x10] sm:$0xf]
    %s1464 = scalar_lea.vmem %s1, 8
    %v1465 = vld [vmem:[%s1464] sm:$0x1]
    %v1469 = vcombine.high %v1461, %v1461
    %v1470 = vcombine.high %v1462, %v1462
    %1471 = vrot.lane.b32.xlu0 %v1461, 94
    %v1472 = vpop.permute.xlu0 %1471
    %1473 = vrot.lane.b32.xlu0 %v1469, 94
    %v1474 = vpop.permute.xlu0 %1473
    %1475 = vrot.lane.b32.xlu0 %v1462, 94
    %v1476 = vpop.permute.xlu0 %1475
    %1477 = vrot.lane.b32.xlu0 %v1470, 94
    %v1478 = vpop.permute.xlu0 %1477
    %1479 = vrot.lane.b32.xlu0 %v1463, 94
    %v1480 = vpop.permute.xlu0 %1479
    %vm1481 = vcmask 769024
    %v1482 = vsel %vm1481, %v1472, %v1474
    %v1483 = vsel %vm1481, %v1474, %v1476
    %v1484 = vsel %vm1481, %v1476, %v1478
    %v1485 = vsel %vm1481, %v1478, %v1480
    %v1487 = vsel %vm57, %v1465, 0
    %v1489 = vsel %vm61, %v1482, 0
    %v1491 = vsel %vm61, %v1483, 0
    %v1493 = vsel %vm61, %v1484, 0
    %v1495 = vsel %vm61, %v1485, 0
    %1497 = vmatprep.subr.mxu0 0.0
    %1498 = vmatpush1.msra.mxu0 0.0
    %1499 = vmatprep.subr.mxu0 0.0
    %1500 = vmatpush1.msra.mxu0 0.0
    %1501 = vmatprep.subr.mxu0 0.0
    %1502 = vmatpush1.msra.mxu0 0.0
    %1503 = vmatprep.subr.mxu0 0.0
    %1504 = vmatpush1.msra.mxu0 0.0
    %1505 = vmatprep.subr.mxu0 0.0
    %1506 = vmatpush1.msra.mxu0 0.0
    %1507 = vmatprep.subr.mxu0 0.0
    %1508 = vmatpush1.msra.mxu0 0.0
    %1509 = vmatprep.subr.mxu0 0.0
    %1510 = vmatpush1.msra.mxu0 0.0
    %1511 = vmatprep.subr.mxu0 0.0
    %1512 = vmatpush1.msra.mxu0 0.0
    %1513 = vmatprep.subr.mxu0 0.0
    %1514 = vmatpush1.msra.mxu0 0.0
    %1515 = vmatprep.subr.mxu0 0.0
    %1516 = vmatpush1.msra.mxu0 0.0
    %1517 = vmatprep.subr.mxu0 0.0
    %1518 = vmatpush1.msra.mxu0 0.0
    %1519 = vmatprep.subr.mxu0 0.0
    %1520 = vmatpush1.msra.mxu0 0.0
    %1521 = vmatprep.subr.mxu0 0.0
    %1522 = vmatpush1.msra.mxu0 0.0
    %1523 = vmatprep.subr.mxu0 0.0
    %1524 = vmatpush1.msra.mxu0 0.0
    %1525 = vmatprep.subr.mxu0 0.0
    %1526 = vmatpush1.msra.mxu0 0.0
    %1527 = vmatprep.subr.mxu0 %v1491
    %1528 = vmatpush1.msra.mxu0 %v1489
    %1529 = vmatprep.subr.mxu0 0.0
    %1530 = vmatpush2.msra.mxu0 0.0
    %1531 = vmatprep.subr.mxu0 0.0
    %1532 = vmatpush2.msra.mxu0 0.0
    %1533 = vmatprep.subr.mxu0 0.0
    %1534 = vmatpush2.msra.mxu0 0.0
    %1535 = vmatprep.subr.mxu0 0.0
    %1536 = vmatpush2.msra.mxu0 0.0
    %1537 = vmatprep.subr.mxu0 0.0
    %1538 = vmatpush2.msra.mxu0 0.0
    %1539 = vmatprep.subr.mxu0 0.0
    %1540 = vmatpush2.msra.mxu0 0.0
    %1541 = vmatprep.subr.mxu0 0.0
    %1542 = vmatpush2.msra.mxu0 0.0
    %1543 = vmatprep.subr.mxu0 0.0
    %1544 = vmatpush2.msra.mxu0 0.0
    %1545 = vmatprep.subr.mxu0 0.0
    %1546 = vmatpush2.msra.mxu0 0.0
    %1547 = vmatprep.subr.mxu0 0.0
    %1548 = vmatpush2.msra.mxu0 0.0
    %1549 = vmatprep.subr.mxu0 0.0
    %1550 = vmatpush2.msra.mxu0 0.0
    %1551 = vmatprep.subr.mxu0 0.0
    %1552 = vmatpush2.msra.mxu0 0.0
    %1553 = vmatprep.subr.mxu0 0.0
    %1554 = vmatpush2.msra.mxu0 0.0
    %1555 = vmatprep.subr.mxu0 0.0
    %1556 = vmatpush2.msra.mxu0 0.0
    %1557 = vmatprep.subr.mxu0 0.0
    %1558 = vmatpush2.msra.mxu0 0.0
    %1559 = vmatprep.subr.mxu0 0.0
    %1560 = vmatpush2.msra.mxu0 0.0
    %1561 = vmatprep.mubr.f32.mxu0 0.0
    %1562 = vmatmul.mubr.f32.gmra.mxu0 %v1487
    %v1563 = vpop.f32.mrf.mxu0
    %v1564 = vadd.f32 0.0, %v1563
    %v1565 = vpop.f32.mrf.mxu0
    %v1566 = vadd.f32 0.0, %v1565
    %1567 = vdwg.mxu0
    %1568 = vmatprep.subr.mxu0 0.0
    %1569 = vmatpush1.msra.mxu0 0.0
    %1570 = vmatprep.subr.mxu0 0.0
    %1571 = vmatpush1.msra.mxu0 0.0
    %1572 = vmatprep.subr.mxu0 0.0
    %1573 = vmatpush1.msra.mxu0 0.0
    %1574 = vmatprep.subr.mxu0 0.0
    %1575 = vmatpush1.msra.mxu0 0.0
    %1576 = vmatprep.subr.mxu0 0.0
    %1577 = vmatpush1.msra.mxu0 0.0
    %1578 = vmatprep.subr.mxu0 0.0
    %1579 = vmatpush1.msra.mxu0 0.0
    %1580 = vmatprep.subr.mxu0 0.0
    %1581 = vmatpush1.msra.mxu0 0.0
    %1582 = vmatprep.subr.mxu0 0.0
    %1583 = vmatpush1.msra.mxu0 0.0
    %1584 = vmatprep.subr.mxu0 0.0
    %1585 = vmatpush1.msra.mxu0 0.0
    %1586 = vmatprep.subr.mxu0 0.0
    %1587 = vmatpush1.msra.mxu0 0.0
    %1588 = vmatprep.subr.mxu0 0.0
    %1589 = vmatpush1.msra.mxu0 0.0
    %1590 = vmatprep.subr.mxu0 0.0
    %1591 = vmatpush1.msra.mxu0 0.0
    %1592 = vmatprep.subr.mxu0 0.0
    %1593 = vmatpush1.msra.mxu0 0.0
    %1594 = vmatprep.subr.mxu0 0.0
    %1595 = vmatpush1.msra.mxu0 0.0
    %1596 = vmatprep.subr.mxu0 0.0
    %1597 = vmatpush1.msra.mxu0 0.0
    %1598 = vmatprep.subr.mxu0 %v1495
    %1599 = vmatpush1.msra.mxu0 %v1493
    %1600 = vmatprep.subr.mxu0 0.0
    %1601 = vmatpush2.msra.mxu0 0.0
    %1602 = vmatprep.subr.mxu0 0.0
    %1603 = vmatpush2.msra.mxu0 0.0
    %1604 = vmatprep.subr.mxu0 0.0
    %1605 = vmatpush2.msra.mxu0 0.0
    %1606 = vmatprep.subr.mxu0 0.0
    %1607 = vmatpush2.msra.mxu0 0.0
    %1608 = vmatprep.subr.mxu0 0.0
    %1609 = vmatpush2.msra.mxu0 0.0
    %1610 = vmatprep.subr.mxu0 0.0
    %1611 = vmatpush2.msra.mxu0 0.0
    %1612 = vmatprep.subr.mxu0 0.0
    %1613 = vmatpush2.msra.mxu0 0.0
    %1614 = vmatprep.subr.mxu0 0.0
    %1615 = vmatpush2.msra.mxu0 0.0
    %1616 = vmatprep.subr.mxu0 0.0
    %1617 = vmatpush2.msra.mxu0 0.0
    %1618 = vmatprep.subr.mxu0 0.0
    %1619 = vmatpush2.msra.mxu0 0.0
    %1620 = vmatprep.subr.mxu0 0.0
    %1621 = vmatpush2.msra.mxu0 0.0
    %1622 = vmatprep.subr.mxu0 0.0
    %1623 = vmatpush2.msra.mxu0 0.0
    %1624 = vmatprep.subr.mxu0 0.0
    %1625 = vmatpush2.msra.mxu0 0.0
    %1626 = vmatprep.subr.mxu0 0.0
    %1627 = vmatpush2.msra.mxu0 0.0
    %1628 = vmatprep.subr.mxu0 0.0
    %1629 = vmatpush2.msra.mxu0 0.0
    %1630 = vmatprep.subr.mxu0 0.0
    %1631 = vmatpush2.msra.mxu0 0.0
    %1632 = vmatprep.mubr.f32.mxu0 0.0
    %1633 = vmatmul.mubr.f32.gmra.mxu0 %v1487
    %v1634 = vpop.f32.mrf.mxu0
    %v1635 = vadd.f32 0.0, %v1634
    %v1636 = vpop.f32.mrf.mxu0
    %v1637 = vadd.f32 0.0, %v1636
    %1638 = vdwg.mxu0
    %v1639 = vadd.f32 %v1457, %v1564
    %v1640 = vadd.f32 %v1458, %v1566
    %v1641 = vadd.f32 %v1459, %v1635
    %v1642 = vadd.f32 %v1460, %v1637
    %v1643 = vld [vmem:[#allocation2] sm:$0x1]
    %1645 = vset.pattern.permute.xlu0 0
    %1646 = vperm.xlu0 %1645, %v1643
    %v1647 = vpop.permute.xlu0 %1646
    %v1649 = vlaneseq
    %v1650 = vshrl.u32 %v1649, 7
    %v1651 = vsub.s32 0, %v1650
    %v1652 = vrot.slane %v1647, %v1651
    %v1653 = vadd.f32 %v1639, %v1652
    %v1654 = vadd.f32 %v1640, %v1652
    %v1655 = vadd.f32 %v1641, %v1652
    %v1656 = vadd.f32 %v1642, %v1652
    %v1657 = vmul.f32 %v1653, 0.5
    %v1658 = vmul.f32 %v1654, 0.5
    %v1659 = vmul.f32 %v1655, 0.5
    %v1660 = vmul.f32 %v1656, 0.5
    %v1661 = vtanh.pop %v1657
    %v1662 = vtanh.pop %v1658
    %v1663 = vtanh.pop %v1659
    %v1664 = vtanh.pop %v1660
    %v1665 = vadd.f32 %v1661, 1.0
    %v1666 = vadd.f32 %v1662, 1.0
    %v1667 = vadd.f32 %v1663, 1.0
    %v1668 = vadd.f32 %v1664, 1.0
    %v1669 = vmul.f32 %v1665, 0.5
    %v1670 = vmul.f32 %v1666, 0.5
    %v1671 = vmul.f32 %v1667, 0.5
    %v1672 = vmul.f32 %v1668, 0.5
    %v1677 = vcombine.low %v1669, %v1670
    %v1678 = vcombine.low %v1671, %v1672
    %v1680 = vunpack.c.l.s4 1966171168
    %v1681 = vunpack.c.0.s8 %v1680
    %v1682 = vlaneseq
    %v1683 = vshrl.u32 %v1682, 7
    %v1684 = vsub.s32 %v1681, %v1683
    %v1685 = vrot.slane %v1677, %v1684
    %v1687 = vunpack.c.l.s4 1966171168
    %v1688 = vunpack.c.0.s8 %v1687
    %v1689 = vlaneseq
    %v1690 = vshrl.u32 %v1689, 7
    %v1691 = vsub.s32 %v1688, %v1690
    %v1692 = vrot.slane %v1678, %v1691
    %v1693 = vcombine.low %v1685, %v1692
    %v1695 = vunpack.c.l.s4 1966171168
    %v1696 = vunpack.c.0.s8 %v1695
    %v1697 = vlaneseq
    %v1698 = vshrl.u32 %v1697, 7
    %v1699 = vsub.s32 %v1696, %v1698
    %v1700 = vrot.slane %v1693, %v1699
    %v1702 = vlaneseq
    %vm1703 = vcmp.ge.s32.totalorder %v1702, 0
    %vm1704 = vcmp.lt.s32.totalorder %v1702, 512
    %vm1705 = vmand %vm1703, %vm1704
    %1706 = vst.msk [vmem:[#allocation6] sm:$0xf] %vm1705, %v1700
    // Predicated region
    $region18: #{tpu_custom_call.1} parent=1 // pred_check
      _
    $region19: #{tpu_custom_call.1} parent=1 // pred_check_branch
      %1708 = sbr.rel (0) target = $region21
    $region20: #{tpu_custom_call.1} parent=1 // pred_region
      %s1710 = ssub.s32 64, 64
      %1711 = vsyncadd [#allocation5], %s1710
      %s1713 = sshll.u32 [#allocation6], 4
      %s1714 = int_to_ptr.vmem [resolvable:$true] %s1713
      %1716 = dma.vmem_to_hbm [thread:$0]  %s1714, 64, %s3, [#allocation5]
    $region21: #{tpu_custom_call.1} parent=1 // pred_fallthru
      _
    // Predicated region
    $region22: #{tpu_custom_call.1} parent=1 // pred_check
      _
    $region23: #{tpu_custom_call.1} parent=1 // pred_check_branch
      %1718 = sbr.rel (0) target = $region25
    $region24: #{tpu_custom_call.1} parent=1 // pred_region
      %1719 = dma.done [#allocation5], 64
    $region25: #{tpu_custom_call.1} parent=1 // pred_fallthru
      _
    %1720 = vsyncpa [#allocation4], 1
    %1721 = vsyncpa [#allocation5], 1

</llo_original>
